<compile_context>
chip_gen: v6e
topology: v6e:2x2x1
jax: 0.10.0
libtpu: 0.0.40
codegen_flags: <defaults>
</compile_context>

<pallas_src>
import jax
import jax.numpy as jnp
from jax.experimental import pallas as pl
from jax.experimental.pallas import tpu as pltpu


def _round_up(x, m):
    return ((x + m - 1) // m) * m


def _pick_tl(L, cap):
    """Largest multiple of 128 that divides L, capped at `cap` (None if none)."""
    d = (min(cap, L) // 128) * 128
    while d >= 128:
        if L % d == 0:
            return d
        d -= 128
    return None


def _tpu_tiling_defaults():
    """Per-generation streamed-block cap + VMEM budget.

    v7x has 64 MiB physical VMEM -> keep tl <= 512 and a 48 MiB scoped limit;
    v5e/v6e have 128 MiB -> a 2x larger streamed block amortizes the per-grid-
    step overhead a bit further."""
    cap, vmem = 512, 48 * 1024 * 1024
    try:
        info = pltpu.get_tpu_info()
        phys = getattr(info, "vmem_capacity_bytes", 0) or 0
        if phys >= 100 * 1024 * 1024:
            cap, vmem = 1024, 96 * 1024 * 1024
    except Exception:
        pass
    return cap, vmem


def pooling_classifier_kernel(seq_ref, mask_ref, cls_ref, inv_ref,
                              wp_ref, bp_ref,
                              wc_cls_ref, wc_mean_ref, bc_ref,
                              out_ref, acc_ref, mbd_ref):
    l = pl.program_id(1)
    tb, tl, H = seq_ref.shape

    # --- init at the start of each L sweep -----------------------------------
    @pl.when(l == 0)
    def _init():
        acc_ref[...] = jnp.zeros_like(acc_ref)
        # Off-diagonal blocks of the block-diagonal mask operand stay zero for
        # the whole kernel; only the (1, tl) diagonal blocks are rewritten
        # every step below.
        mbd_ref[...] = jnp.zeros_like(mbd_ref)

    # --- streaming path: masked sum over this L tile, on the MXU -------------
    # acc[b, :] += mask[b, :] @ seq[b, :, :] for every batch row b, expressed
    # as ONE (tb, tb*tl) @ (tb*tl, H) matmul with a block-diagonal mask.  The
    # big seq tile flows through the (otherwise idle) MXU with f32
    # accumulation; the VPU only refreshes the tiny mask diagonal (no
    # per-element cast / broadcast / multiply / reduce in the hot loop).
    m = mask_ref[...]                                        # (tb, tl) f32
    for b in range(tb):                                      # static unroll
        mbd_ref[pl.ds(b, 1), pl.ds(b * tl, tl)] = m[b:b + 1, :]

    seq2d = seq_ref[...].reshape(tb * tl, H)                 # free leading-dim merge
    acc_ref[...] += jnp.dot(mbd_ref[...].astype(seq2d.dtype), seq2d,
                            preferred_element_type=jnp.float32)

    # --- finalize on the last L tile ------------------------------------------
    @pl.when(l == pl.num_programs(1) - 1)
    def _finalize():
        # masked mean via precomputed (guarded) reciprocal length
        mean = acc_ref[...] * inv_ref[...]                   # (tb, H) * (tb, 1)

        # BERT pooler: tanh(Linear(cls_token)).  bf16 cls feeds the dot
        # directly (promotion widens it); accumulation is f32.
        pooled = jnp.tanh(
            jnp.dot(cls_ref[...], wp_ref[...],
                    preferred_element_type=jnp.float32) + bp_ref[...])

        # dropout(p=0.5) is identity in eval mode
        # TODO(synk): training-mode dropout omitted (inference semantics).

        # classifier on cat([cls, mean]) with the concat fused away
        logits = (
            jnp.dot(pooled, wc_cls_ref[...], preferred_element_type=jnp.float32)
            + jnp.dot(mean, wc_mean_ref[...], preferred_element_type=jnp.float32)
            + bc_ref[...])
        out_ref[...] = logits.astype(out_ref.dtype)


def pooling_classifier(seq, attention_mask, w_pool, b_pool, w_cls, b_cls,
                       *, tl=None, tb=None):
    """seq: (B, L, H) f32/bf16 encoder output, attention_mask: (B, L) int,
    w_pool: (H, H), b_pool: (H,), w_cls: (2H, C), b_cls: (C,).

    Weights may be passed as bf16 to halve resident VMEM (the MXU consumes
    bf16 directly; all accumulation stays f32)."""
    B, L, H = seq.shape
    C = w_cls.shape[1]
    f32 = jnp.float32

    cap, vmem_limit = _tpu_tiling_defaults()

    # --- batch tile -----------------------------------------------------------
    # B > 8: tb=8 gives >= 2 batch blocks so v7x's two TensorCores both get
    # work along the "parallel" axis.  B <= 8: a single full-dim block keeps
    # every BlockSpec sublane dim either a multiple of 8 or the full dim.
    if tb is None:
        tb = 8 if B > 8 else B
    Bp = _round_up(B, tb)

    # --- L tile ---------------------------------------------------------------
    # Prefer a multiple of 128 (lane-dense mask tile) that divides L so the
    # seq stream needs no wrapper-side jnp.pad (which would cost a full extra
    # HBM copy of the encoder output).
    if tl is None:
        tl = _pick_tl(L, cap)
        if tl is None:
            tl = L if L <= 2 * cap else cap    # whole-L block, else pad fallback
    if tl != L and tl % 128 != 0:
        tl = min(_round_up(tl, 128), _round_up(L, 128))
    Lp = _round_up(L, tl)

    Cp = _round_up(C, 128)                     # lane-dense (unmasked) output store

    # --- one-time wrapper prep (tiny vs. the seq stream) ----------------------
    maskf = attention_mask.astype(f32)                                 # (B, L)
    counts = jnp.maximum(jnp.sum(maskf, axis=1, keepdims=True), 1.0)   # /0 guard
    inv_len = 1.0 / counts                                             # (B, 1)
    cls_tok = seq[:, 0, :]                                             # (B, H)

    # seq is only padded (extra HBM copy) in the fallback case where the tiles
    # do not divide (B, L); zero padding keeps the block-diagonal matmul
    # NaN-free (0 * 0, never 0 * uninitialized data).
    if (Bp, Lp) != (B, L):
        seq_s = jnp.pad(seq, ((0, Bp - B), (0, Lp - L), (0, 0)))
    else:
        seq_s = seq
    mask_s = jnp.pad(maskf, ((0, Bp - B), (0, Lp - L)))                # (Bp, Lp)
    cls_p = jnp.pad(cls_tok, ((0, Bp - B), (0, 0)))
    inv_p = jnp.pad(inv_len, ((0, Bp - B), (0, 0)))

    # classifier weight split (fuses the concat) + 128-lane output padding
    wc_cls = jnp.pad(w_cls[:H, :], ((0, 0), (0, Cp - C)))
    wc_mean = jnp.pad(w_cls[H:, :], ((0, 0), (0, Cp - C)))
    bc2 = jnp.pad(b_cls.reshape(1, C), ((0, 0), (0, Cp - C)))
    bp2 = b_pool.reshape(1, H)

    nb, nl = Bp // tb, Lp // tl

    grid_spec = pltpu.PrefetchScalarGridSpec(
        num_scalar_prefetch=0,
        grid=(nb, nl),                 # batch (parallel) first, L (reduction) last
        in_specs=[
            pl.BlockSpec((tb, tl, H), lambda b, l: (b, l, 0)),   # seq (streamed)
            pl.BlockSpec((tb, tl), lambda b, l: (b, l)),         # mask (lane-dense)
            pl.BlockSpec((tb, H), lambda b, l: (b, 0)),          # cls token
            pl.BlockSpec((tb, 1), lambda b, l: (b, 0)),          # 1/len
            pl.BlockSpec((H, H), lambda b, l: (0, 0)),           # w_pool (resident)
            pl.BlockSpec((1, H), lambda b, l: (0, 0)),           # b_pool (resident)
            pl.BlockSpec((H, Cp), lambda b, l: (0, 0)),          # w_cls, cls half
            pl.BlockSpec((H, Cp), lambda b, l: (0, 0)),          # w_cls, mean half
            pl.BlockSpec((1, Cp), lambda b, l: (0, 0)),          # b_cls (resident)
        ],
        out_specs=pl.BlockSpec((tb, Cp), lambda b, l: (b, 0)),   # resident over l
        scratch_shapes=[
            pltpu.VMEM((tb, H), f32),            # masked-sum accumulator
            pltpu.VMEM((tb, tb * tl), f32),      # block-diagonal mask operand
        ],
    )

    out = pl.pallas_call(
        pooling_classifier_kernel,
        out_shape=jax.ShapeDtypeStruct((Bp, Cp), f32),
        grid_spec=grid_spec,
        compiler_params=pltpu.CompilerParams(
            dimension_semantics=("parallel", "arbitrary"),
            vmem_limit_bytes=vmem_limit,
        ),
    )(seq_s, mask_s, cls_p, inv_p, w_pool, bp2, wc_cls, wc_mean, bc2)

    return out[:B, :C]


if __name__ == "__main__":
    # Scaled-down BERT-like shapes chosen to exercise the real tiling:
    #   B=16 -> 2 batch blocks (tb=8, "parallel" axis feeds both v7x cores)
    #   L=256, tl=128 -> 2 streamed L tiles (accumulate + finalize path)
    #   H=128, Cp=128 -> all blocks (8,128)-aligned, lane-dense output.
    B, L, H, C = 16, 256, 128, 4
    key = jax.random.PRNGKey(0)
    k_seq, k_len, k_wp, k_bp, k_wc, k_bc = jax.random.split(key, 6)

    seq_f32 = jax.random.normal(k_seq, (B, L, H), dtype=jnp.float32)
    lengths = jax.random.randint(k_len, (B,), minval=L // 4, maxval=L + 1)
    attention_mask = (jnp.arange(L)[None, :] < lengths[:, None]).astype(jnp.int32)

    w_pool = 0.1 * jax.random.normal(k_wp, (H, H), dtype=jnp.float32)
    b_pool = 0.1 * jax.random.normal(k_bp, (H,), dtype=jnp.float32)
    w_cls = 0.1 * jax.random.normal(k_wc, (2 * H, C), dtype=jnp.float32)
    b_cls = 0.1 * jax.random.normal(k_bc, (C,), dtype=jnp.float32)

    # Stream the encoder output in bf16 (halves HBM traffic on the mem-bound
    # path); all kernel accumulation is f32.
    seq = seq_f32.astype(jnp.bfloat16)

    out = pooling_classifier(seq, attention_mask, w_pool, b_pool, w_cls, b_cls,
                             tl=128)
    out = jax.block_until_ready(out)

    # Pure-JAX reference, built from the same bf16-rounded encoder output.
    seq_ref = seq.astype(jnp.float32)
    maskf = attention_mask.astype(jnp.float32)[:, :, None]
    cls_ref = jnp.tanh(seq_ref[:, 0, :] @ w_pool + b_pool)
    mean_ref = (seq_ref * maskf).sum(1) / jnp.maximum(maskf.sum(1), 1.0)
    x_ref = jnp.concatenate([cls_ref, mean_ref], axis=-1)
    ref = x_ref @ w_cls + b_cls

    assert out.shape == (B, C)
    err = jnp.max(jnp.abs(out - ref))
    assert jnp.allclose(out, ref, atol=1e-3, rtol=1e-3), (err, out, ref)
    print("KERNEL_OK")
</pallas_src>

<mosaic_0001>
module attributes {stable_mosaic.version = 11 : i64} {
  func.func @pooling_classifier_kernel(%arg0: i32, %arg1: i32, %arg2: memref<8x128x128xbf16, #tpu.memory_space<vmem>>, %arg3: memref<8x128xf32, #tpu.memory_space<vmem>>, %arg4: memref<8x128xbf16, #tpu.memory_space<vmem>>, %arg5: memref<8x1xf32, #tpu.memory_space<vmem>>, %arg6: memref<128x128xf32, #tpu.memory_space<vmem>>, %arg7: memref<1x128xf32, #tpu.memory_space<vmem>>, %arg8: memref<128x128xf32, #tpu.memory_space<vmem>>, %arg9: memref<128x128xf32, #tpu.memory_space<vmem>>, %arg10: memref<1x128xf32, #tpu.memory_space<vmem>>, %arg11: memref<8x128xf32, #tpu.memory_space<vmem>>, %arg12: memref<8x128xf32, #tpu.memory_space<vmem>>, %arg13: memref<8x1024xf32, #tpu.memory_space<vmem>>) attributes {dimension_semantics = [#tpu.dimension_semantics<parallel>, #tpu.dimension_semantics<arbitrary>], iteration_bounds = array<i64: 2, 2>, scalar_prefetch = 0 : i64, scratch_operands = 2 : i64, tpu.core_type = #tpu.core_type<tc>, window_params = [{transform_indices = @transform_0, window_bounds = array<i64: 8, 128, 128>}, {transform_indices = @transform_1, window_bounds = array<i64: 8, 128>}, {transform_indices = @transform_2, window_bounds = array<i64: 8, 128>}, {transform_indices = @transform_3, window_bounds = array<i64: 8, 1>}, {pipeline_mode = #tpu.pipeline_mode<synchronous>, transform_indices = @transform_4, window_bounds = array<i64: 128, 128>}, {pipeline_mode = #tpu.pipeline_mode<synchronous>, transform_indices = @transform_5, window_bounds = array<i64: 1, 128>}, {pipeline_mode = #tpu.pipeline_mode<synchronous>, transform_indices = @transform_6, window_bounds = array<i64: 128, 128>}, {pipeline_mode = #tpu.pipeline_mode<synchronous>, transform_indices = @transform_7, window_bounds = array<i64: 128, 128>}, {pipeline_mode = #tpu.pipeline_mode<synchronous>, transform_indices = @transform_8, window_bounds = array<i64: 1, 128>}, {transform_indices = @transform_9, window_bounds = array<i64: 8, 128>}]} {
    %c0_i32 = arith.constant 0 : i32
    %0 = arith.cmpi eq, %arg1, %c0_i32 : i32
    %1 = arith.extui %0 : i1 to i32
    %c0_i32_0 = arith.constant 0 : i32
    %2 = arith.cmpi ne, %1, %c0_i32_0 : i32
    scf.if %2 {
      %cst_14 = arith.constant 0.000000e+00 : f32
      %31 = vector.broadcast %cst_14 : f32 to vector<8x128xf32>
      %c0_15 = arith.constant 0 : index
      %c0_16 = arith.constant 0 : index
      %32 = vector.load %arg12[%c0_15, %c0_16] : memref<8x128xf32, #tpu.memory_space<vmem>>, vector<8x128xf32>
      tpu.vector_store %arg12[%c0_15, %c0_16], %31 {strides = array<i32>} : memref<8x128xf32, #tpu.memory_space<vmem>>, vector<8x128xf32>,
      %cst_17 = arith.constant 0.000000e+00 : f32
      %33 = vector.broadcast %cst_17 : f32 to vector<8x1024xf32>
      %c0_18 = arith.constant 0 : index
      %c0_19 = arith.constant 0 : index
      %34 = vector.load %arg13[%c0_18, %c0_19] : memref<8x1024xf32, #tpu.memory_space<vmem>>, vector<8x1024xf32>
      tpu.vector_store %arg13[%c0_18, %c0_19], %33 {strides = array<i32>} : memref<8x1024xf32, #tpu.memory_space<vmem>>, vector<8x1024xf32>,
    } else {
    }
    %c0 = arith.constant 0 : index
    %c0_1 = arith.constant 0 : index
    %3 = vector.load %arg3[%c0, %c0_1] : memref<8x128xf32, #tpu.memory_space<vmem>>, vector<8x128xf32>
    %4 = vector.extract_strided_slice %3 {offsets = [0, 0], sizes = [1, 128], strides = [1, 1]} : vector<8x128xf32> to vector<1x128xf32>
    %c0_2 = arith.constant 0 : index
    %c0_3 = arith.constant 0 : index
    %5 = vector.load %arg13[%c0_2, %c0_3] : memref<8x1024xf32, #tpu.memory_space<vmem>>, vector<1x128xf32>
    tpu.vector_store %arg13[%c0_2, %c0_3], %4 {strides = array<i32>} : memref<8x1024xf32, #tpu.memory_space<vmem>>, vector<1x128xf32>,
    %6 = vector.extract_strided_slice %3 {offsets = [1, 0], sizes = [1, 128], strides = [1, 1]} : vector<8x128xf32> to vector<1x128xf32>
    %c1 = arith.constant 1 : index
    %c128 = arith.constant 128 : index
    %7 = vector.load %arg13[%c1, %c128] : memref<8x1024xf32, #tpu.memory_space<vmem>>, vector<1x128xf32>
    tpu.vector_store %arg13[%c1, %c128], %6 {strides = array<i32>} : memref<8x1024xf32, #tpu.memory_space<vmem>>, vector<1x128xf32>,
    %8 = vector.extract_strided_slice %3 {offsets = [2, 0], sizes = [1, 128], strides = [1, 1]} : vector<8x128xf32> to vector<1x128xf32>
    %c2 = arith.constant 2 : index
    %c256 = arith.constant 256 : index
    %9 = vector.load %arg13[%c2, %c256] : memref<8x1024xf32, #tpu.memory_space<vmem>>, vector<1x128xf32>
    tpu.vector_store %arg13[%c2, %c256], %8 {strides = array<i32>} : memref<8x1024xf32, #tpu.memory_space<vmem>>, vector<1x128xf32>,
    %10 = vector.extract_strided_slice %3 {offsets = [3, 0], sizes = [1, 128], strides = [1, 1]} : vector<8x128xf32> to vector<1x128xf32>
    %c3 = arith.constant 3 : index
    %c384 = arith.constant 384 : index
    %11 = vector.load %arg13[%c3, %c384] : memref<8x1024xf32, #tpu.memory_space<vmem>>, vector<1x128xf32>
    tpu.vector_store %arg13[%c3, %c384], %10 {strides = array<i32>} : memref<8x1024xf32, #tpu.memory_space<vmem>>, vector<1x128xf32>,
    %12 = vector.extract_strided_slice %3 {offsets = [4, 0], sizes = [1, 128], strides = [1, 1]} : vector<8x128xf32> to vector<1x128xf32>
    %c4 = arith.constant 4 : index
    %c512 = arith.constant 512 : index
    %13 = vector.load %arg13[%c4, %c512] : memref<8x1024xf32, #tpu.memory_space<vmem>>, vector<1x128xf32>
    tpu.vector_store %arg13[%c4, %c512], %12 {strides = array<i32>} : memref<8x1024xf32, #tpu.memory_space<vmem>>, vector<1x128xf32>,
    %14 = vector.extract_strided_slice %3 {offsets = [5, 0], sizes = [1, 128], strides = [1, 1]} : vector<8x128xf32> to vector<1x128xf32>
    %c5 = arith.constant 5 : index
    %c640 = arith.constant 640 : index
    %15 = vector.load %arg13[%c5, %c640] : memref<8x1024xf32, #tpu.memory_space<vmem>>, vector<1x128xf32>
    tpu.vector_store %arg13[%c5, %c640], %14 {strides = array<i32>} : memref<8x1024xf32, #tpu.memory_space<vmem>>, vector<1x128xf32>,
    %16 = vector.extract_strided_slice %3 {offsets = [6, 0], sizes = [1, 128], strides = [1, 1]} : vector<8x128xf32> to vector<1x128xf32>
    %c6 = arith.constant 6 : index
    %c768 = arith.constant 768 : index
    %17 = vector.load %arg13[%c6, %c768] : memref<8x1024xf32, #tpu.memory_space<vmem>>, vector<1x128xf32>
    tpu.vector_store %arg13[%c6, %c768], %16 {strides = array<i32>} : memref<8x1024xf32, #tpu.memory_space<vmem>>, vector<1x128xf32>,
    %18 = vector.extract_strided_slice %3 {offsets = [7, 0], sizes = [1, 128], strides = [1, 1]} : vector<8x128xf32> to vector<1x128xf32>
    %c7 = arith.constant 7 : index
    %c896 = arith.constant 896 : index
    %19 = vector.load %arg13[%c7, %c896] : memref<8x1024xf32, #tpu.memory_space<vmem>>, vector<1x128xf32>
    tpu.vector_store %arg13[%c7, %c896], %18 {strides = array<i32>} : memref<8x1024xf32, #tpu.memory_space<vmem>>, vector<1x128xf32>,
    %c0_4 = arith.constant 0 : index
    %c0_5 = arith.constant 0 : index
    %c0_6 = arith.constant 0 : index
    %20 = vector.load %arg2[%c0_4, %c0_5, %c0_6] : memref<8x128x128xbf16, #tpu.memory_space<vmem>>, vector<8x128x128xbf16>
    %21 = vector.shape_cast %20 : vector<8x128x128xbf16> to vector<1024x128xbf16>
    %c0_7 = arith.constant 0 : index
    %c0_8 = arith.constant 0 : index
    %22 = vector.load %arg12[%c0_7, %c0_8] : memref<8x128xf32, #tpu.memory_space<vmem>>, vector<8x128xf32>
    %c0_9 = arith.constant 0 : index
    %c0_10 = arith.constant 0 : index
    %23 = vector.load %arg13[%c0_9, %c0_10] : memref<8x1024xf32, #tpu.memory_space<vmem>>, vector<8x1024xf32>
    %24 = arith.truncf %23 : vector<8x1024xf32> to vector<8x1024xbf16>
    %cst = arith.constant dense<0.000000e+00> : vector<8x128xf32>
    %25 = tpu.matmul %24, %21, %cst {dimension_numbers = #tpu.dot_dimension_numbers<[1], [0], [0], [1], [0, 0, 1, 1], [], []>} : vector<8x1024xbf16>, vector<1024x128xbf16>, vector<8x128xf32> -> vector<8x128xf32>
    %26 = arith.addf %22, %25 : vector<8x128xf32>
    %c0_11 = arith.constant 0 : index
    %c0_12 = arith.constant 0 : index
    %27 = vector.load %arg12[%c0_11, %c0_12] : memref<8x128xf32, #tpu.memory_space<vmem>>, vector<8x128xf32>
    tpu.vector_store %arg12[%c0_11, %c0_12], %26 {strides = array<i32>} : memref<8x128xf32, #tpu.memory_space<vmem>>, vector<8x128xf32>,
    %c1_i32 = arith.constant 1 : i32
    %28 = arith.cmpi eq, %arg1, %c1_i32 : i32
    %29 = arith.extui %28 : i1 to i32
    %c0_i32_13 = arith.constant 0 : i32
    %30 = arith.cmpi ne, %29, %c0_i32_13 : i32
    scf.if %30 {
      %c0_14 = arith.constant 0 : index
      %c0_15 = arith.constant 0 : index
      %31 = vector.load %arg12[%c0_14, %c0_15] : memref<8x128xf32, #tpu.memory_space<vmem>>, vector<8x128xf32>
      %c0_16 = arith.constant 0 : index
      %c0_17 = arith.constant 0 : index
      %32 = vector.load %arg5[%c0_16, %c0_17] : memref<8x1xf32, #tpu.memory_space<vmem>>, vector<8x1xf32>
      %33 = vector.broadcast %32 : vector<8x1xf32> to vector<8x128xf32>
      %34 = arith.mulf %31, %33 : vector<8x128xf32>
      %c0_18 = arith.constant 0 : index
      %c0_19 = arith.constant 0 : index
      %35 = vector.load %arg4[%c0_18, %c0_19] : memref<8x128xbf16, #tpu.memory_space<vmem>>, vector<8x128xbf16>
      %c0_20 = arith.constant 0 : index
      %c0_21 = arith.constant 0 : index
      %36 = vector.load %arg6[%c0_20, %c0_21] : memref<128x128xf32, #tpu.memory_space<vmem>>, vector<128x128xf32>
      %cst_22 = arith.constant dense<0.000000e+00> : vector<8x128xf32>
      %37 = tpu.matmul %35, %36, %cst_22 {dimension_numbers = #tpu.dot_dimension_numbers<[1], [0], [0], [1], [0, 0, 1, 1], [], []>} : vector<8x128xbf16>, vector<128x128xf32>, vector<8x128xf32> -> vector<8x128xf32>
      %c0_23 = arith.constant 0 : index
      %c0_24 = arith.constant 0 : index
      %38 = vector.load %arg7[%c0_23, %c0_24] : memref<1x128xf32, #tpu.memory_space<vmem>>, vector<1x128xf32>
      %39 = vector.broadcast %38 : vector<1x128xf32> to vector<8x128xf32>
      %40 = arith.addf %37, %39 : vector<8x128xf32>
      %41 = math.tanh %40 : vector<8x128xf32>
      %c0_25 = arith.constant 0 : index
      %c0_26 = arith.constant 0 : index
      %42 = vector.load %arg8[%c0_25, %c0_26] : memref<128x128xf32, #tpu.memory_space<vmem>>, vector<128x128xf32>
      %cst_27 = arith.constant dense<0.000000e+00> : vector<8x128xf32>
      %43 = tpu.matmul %41, %42, %cst_27 {dimension_numbers = #tpu.dot_dimension_numbers<[1], [0], [0], [1], [0, 0, 1, 1], [], []>} : vector<8x128xf32>, vector<128x128xf32>, vector<8x128xf32> -> vector<8x128xf32>
      %c0_28 = arith.constant 0 : index
      %c0_29 = arith.constant 0 : index
      %44 = vector.load %arg9[%c0_28, %c0_29] : memref<128x128xf32, #tpu.memory_space<vmem>>, vector<128x128xf32>
      %cst_30 = arith.constant dense<0.000000e+00> : vector<8x128xf32>
      %45 = tpu.matmul %34, %44, %cst_30 {dimension_numbers = #tpu.dot_dimension_numbers<[1], [0], [0], [1], [0, 0, 1, 1], [], []>} : vector<8x128xf32>, vector<128x128xf32>, vector<8x128xf32> -> vector<8x128xf32>
      %46 = arith.addf %43, %45 : vector<8x128xf32>
      %c0_31 = arith.constant 0 : index
      %c0_32 = arith.constant 0 : index
      %47 = vector.load %arg10[%c0_31, %c0_32] : memref<1x128xf32, #tpu.memory_space<vmem>>, vector<1x128xf32>
      %48 = vector.broadcast %47 : vector<1x128xf32> to vector<8x128xf32>
      %49 = arith.addf %46, %48 : vector<8x128xf32>
      %c0_33 = arith.constant 0 : index
      %c0_34 = arith.constant 0 : index
      %50 = vector.load %arg11[%c0_33, %c0_34] : memref<8x128xf32, #tpu.memory_space<vmem>>, vector<8x128xf32>
      tpu.vector_store %arg11[%c0_33, %c0_34], %49 {strides = array<i32>} : memref<8x128xf32, #tpu.memory_space<vmem>>, vector<8x128xf32>,
    } else {
    }
    return
  }
  func.func @transform_0(%arg0: i32, %arg1: i32) -> (i32, i32, i32) {
    %c0_i32 = arith.constant 0 : i32
    %c0_i32_0 = arith.constant 0 : i32
    return %arg0, %arg1, %c0_i32 : i32, i32, i32
  }
  func.func @transform_1(%arg0: i32, %arg1: i32) -> (i32, i32) {
    %c0_i32 = arith.constant 0 : i32
    return %arg0, %arg1 : i32, i32
  }
  func.func @transform_2(%arg0: i32, %arg1: i32) -> (i32, i32) {
    %c0_i32 = arith.constant 0 : i32
    %c0_i32_0 = arith.constant 0 : i32
    return %arg0, %c0_i32 : i32, i32
  }
  func.func @transform_3(%arg0: i32, %arg1: i32) -> (i32, i32) {
    %c0_i32 = arith.constant 0 : i32
    %c0_i32_0 = arith.constant 0 : i32
    return %arg0, %c0_i32 : i32, i32
  }
  func.func @transform_4(%arg0: i32, %arg1: i32) -> (i32, i32) {
    %c0_i32 = arith.constant 0 : i32
    %c0_i32_0 = arith.constant 0 : i32
    %c0_i32_1 = arith.constant 0 : i32
    return %c0_i32, %c0_i32_0 : i32, i32
  }
  func.func @transform_5(%arg0: i32, %arg1: i32) -> (i32, i32) {
    %c0_i32 = arith.constant 0 : i32
    %c0_i32_0 = arith.constant 0 : i32
    %c0_i32_1 = arith.constant 0 : i32
    return %c0_i32, %c0_i32_0 : i32, i32
  }
  func.func @transform_6(%arg0: i32, %arg1: i32) -> (i32, i32) {
    %c0_i32 = arith.constant 0 : i32
    %c0_i32_0 = arith.constant 0 : i32
    %c0_i32_1 = arith.constant 0 : i32
    return %c0_i32, %c0_i32_0 : i32, i32
  }
  func.func @transform_7(%arg0: i32, %arg1: i32) -> (i32, i32) {
    %c0_i32 = arith.constant 0 : i32
    %c0_i32_0 = arith.constant 0 : i32
    %c0_i32_1 = arith.constant 0 : i32
    return %c0_i32, %c0_i32_0 : i32, i32
  }
  func.func @transform_8(%arg0: i32, %arg1: i32) -> (i32, i32) {
    %c0_i32 = arith.constant 0 : i32
    %c0_i32_0 = arith.constant 0 : i32
    %c0_i32_1 = arith.constant 0 : i32
    return %c0_i32, %c0_i32_0 : i32, i32
  }
  func.func @transform_9(%arg0: i32, %arg1: i32) -> (i32, i32) {
    %c0_i32 = arith.constant 0 : i32
    %c0_i32_0 = arith.constant 0 : i32
    return %arg0, %c0_i32 : i32, i32
  }
}

</mosaic_0001>

<llo_original>
// kernel: tpu_custom_call.1
$region0: #{tpu_custom_call.1}
  #allocation0 [shape = 'u32[]', space=smem, size = 0x4, offset = 0x4, fixed_abs, tag = 'smem constant byte address 0x4 - core index']
  #allocation1 [shape = 'u32[144,128]{1,0:T(1,128)}', space=vmem, size = 0x12000, scoped, tag = 'internal scratch']
  #allocation2 [shape = 'f32[8,128]{1,0:T(8,128)}', space=vmem, size = 0x1000, scoped, tag = 'scratch operand']
  #allocation3 [shape = 'f32[8,1024]{1,0:T(8,128)}', space=vmem, size = 0x8000, scoped, tag = 'scratch operand']
  #allocation14 [shape = 's32[]', space=sflag, size = 0x4, offset = 0, fixed_abs, tag = 'sflag constant byte address 0x0 - dummy sync flag']
  %s0 = inlined_call_operand.hbm [shape: bf16[16,256,128], index: 0, kind: input, shape index: {}]
  %s1 = inlined_call_operand.hbm [shape: f32[16,256], index: 1, kind: input, shape index: {}]
  %s2 = inlined_call_operand.vmem [shape: bf16[16,128], index: 2, kind: input, shape index: {}]
  %s3 = inlined_call_operand.vmem [shape: f32[16,1], index: 3, kind: input, shape index: {}]
  %s4 = inlined_call_operand.hbm [shape: f32[128,128], index: 4, kind: input, shape index: {}]
  %s5 = inlined_call_operand.vmem [shape: f32[1,128], index: 5, kind: input, shape index: {}]
  %s6 = inlined_call_operand.hbm [shape: f32[128,128], index: 6, kind: input, shape index: {}]
  %s7 = inlined_call_operand.hbm [shape: f32[128,128], index: 7, kind: input, shape index: {}]
  %s8 = inlined_call_operand.vmem [shape: f32[1,128], index: 8, kind: input, shape index: {}]
  %s9 = inlined_call_operand.hbm [shape: f32[16,128], index: 9, kind: output, shape index: {}]
  %s10 = sld [smem:[#allocation0]]
  $region97: #{tpu_custom_call.1} parent=0
    _
  %s12 = ssub.s32 1, %s10
  %s13 = scalar_select 0, %s12, %s10
  $region1: #{tpu_custom_call.1} parent=0
    #allocation4 [shape = 'u8[524288]{0}', space=vmem, size = 0x80000, scoped, tag = 'input window, operand 0']
    #allocation5 [shape = 's32[2]{0}', space=sflag, size = 0x8, scoped, tag = 'scoped memory for tpu_custom_call.1']
    #allocation6 [shape = 's32[2]{0}', space=sflag, size = 0x8, scoped, tag = 'scoped memory for tpu_custom_call.1']
    #allocation7 [shape = 'u8[8192]{0}', space=vmem, size = 0x2000, scoped, tag = 'input window, operand 1']
    #allocation8 [shape = 's32[2]{0}', space=sflag, size = 0x8, scoped, tag = 'scoped memory for tpu_custom_call.1']
    #allocation9 [shape = 'u8[65536]{0}', space=vmem, size = 0x10000, scoped, tag = 'input window, operand 4, single buffered']
    #allocation10 [shape = 'u8[65536]{0}', space=vmem, size = 0x10000, scoped, tag = 'input window, operand 6, single buffered']
    #allocation11 [shape = 's32[1]{0}', space=sflag, size = 0x4, scoped, tag = 'scoped memory for tpu_custom_call.1']
    #allocation12 [shape = 'u8[65536]{0}', space=vmem, size = 0x10000, scoped, tag = 'input window, operand 7, single buffered']
    #allocation13 [shape = 'u8[8192]{0}', space=vmem, size = 0x2000, scoped, tag = 'output window, operand 0']
    %14 = vsyncpa [#allocation5], 0
    %s15 = scalar_lea.sflag [#allocation5], 1
    %16 = vsyncpa %s15, 0
    %17 = vsyncpa [#allocation8], 0
    %s18 = scalar_lea.sflag [#allocation8], 1
    %19 = vsyncpa %s18, 0
    %20 = vsyncpa [#allocation11], 0
    %21 = vsyncpa [#allocation6], 0
    %s22 = scalar_lea.sflag [#allocation6], 1
    %23 = vsyncpa %s22, 0
    loop: start=0, step=1, limit=6
    $region2: #{tpu_custom_call.1} parent=1 // loop_pre_header
      _
    $region3: #{tpu_custom_call.1} parent=1 // loop_header
      %s25 = sphi 0, %s29
      %p26 = scmp.ge.s32.totalorder %s25, 6
      %s32 = sphi 0, %s44
      %s33 = sphi 0, %s40
      %s34 = sphi 0, %s32
      %s35 = sphi 0, %s33
      %s36 = sphi 0, %s34
      %s37 = sphi 0, %s35
      %s49 = sphi 0, %s51
      %s52 = sphi 0, %s49
      %s53 = sphi 0, %s52
      %s69 = sphi 0, %s53
      %s77 = sphi 0, %s79
      %s80 = sphi 0, %s77
      %s81 = sphi 0, %s80
      %s97 = sphi 0, %s81
      %s103 = sphi 0, %s105
      %s106 = sphi 0, %s103
      %s107 = sphi 0, %s106
      %s123 = sphi 0, %s107
      %s129 = sphi 0, %s131
      %s132 = sphi 0, %s129
      %s133 = sphi 0, %s132
      %s149 = sphi 0, %s133
      %s153 = sphi 0, %s153
      %s155 = sphi 0, %s153
      %s156 = sphi 0, %s155
      %s170 = sphi 0, %s156
      %s174 = sphi 0, %s174
      %s176 = sphi 0, %s174
      %s177 = sphi 0, %s176
      %s191 = sphi 0, %s177
      %s195 = sphi 0, %s195
      %s197 = sphi 0, %s195
      %s198 = sphi 0, %s197
      %s212 = sphi 0, %s198
      %s216 = sphi 0, %s216
      %s218 = sphi 0, %s216
      %s219 = sphi 0, %s218
      %s233 = sphi 0, %s219
      %s237 = sphi 0, %s237
      %s239 = sphi 0, %s237
      %s240 = sphi 0, %s239
      %s254 = sphi 0, %s240
      %s260 = sphi 0, %s262
      %s263 = sphi 0, %s260
      %s264 = sphi 0, %s263
      %s280 = sphi 0, %s264
    $region4: #{tpu_custom_call.1} parent=1 // loop_header_branch
      %28 = sbr.rel (%p26) target = $region8
    $region5: #{tpu_custom_call.1} parent=1 // loop_body
      %s30 = ssub.s32 %s25, 1
      %s31 = ssub.s32 %s25, 2
      %s38 = sadd.s32 1, %s33
      %p39 = scmp.ge.s32.totalorder %s38, 2
      %s40 = scalar_select %p39, 0, %s38
      %s41 = sadd.s32 1, %s32
      %s42 = scalar_select %p39, %s41, %s32
      %p43 = scmp.ge.s32.totalorder %s42, 2
      %s44 = scalar_select %p43, 0, %s42
      %s45 = ssub.s32 %s32, %s44
      %s46 = ssub.s32 %s33, %s40
      %s47 = sor.u32 %s45, %s46
      %p48 = scmp.eq.s32.totalorder %s47, 0
      %s50 = sadd.s32 %s49, 1
      %s51 = scalar_select %p48, %s49, %s50
      %p54 = pneg %p48
      %p55 = scmp.eq.s32.totalorder %s25, 3
      %p56 = por %p54, %p55
      %p57 = scmp.ne.s32.totalorder %s49, %s52
      %p58 = scmp.eq.s32.totalorder %s25, 0
      %p59 = por %p57, %p58
      %p60 = scmp.ne.s32.totalorder %s49, %s52
      %p61 = scmp.eq.s32.totalorder %s30, 3
      %p62 = por %p60, %p61
      %p63 = scmp.ne.s32.totalorder %s52, %s53
      %p64 = scmp.eq.s32.totalorder %s30, 0
      %p65 = por %p63, %p64
      %p66 = scmp.ne.s32.totalorder %s52, %s53
      %p67 = scmp.eq.s32.totalorder %s31, 3
      %p68 = por %p66, %p67
      %p70 = scmp.ne.s32.totalorder %s53, %s69
      %p71 = scmp.eq.s32.totalorder %s31, 0
      %p72 = por %p70, %p71
      %s73 = ssub.s32 %s32, %s44
      %s74 = ssub.s32 %s33, %s40
      %s75 = sor.u32 %s73, %s74
      %p76 = scmp.eq.s32.totalorder %s75, 0
      %s78 = sadd.s32 %s77, 1
      %s79 = scalar_select %p76, %s77, %s78
      %p82 = pneg %p76
      %p83 = scmp.eq.s32.totalorder %s25, 3
      %p84 = por %p82, %p83
      %p85 = scmp.ne.s32.totalorder %s77, %s80
      %p86 = scmp.eq.s32.totalorder %s25, 0
      %p87 = por %p85, %p86
      %p88 = scmp.ne.s32.totalorder %s77, %s80
      %p89 = scmp.eq.s32.totalorder %s30, 3
      %p90 = por %p88, %p89
      %p91 = scmp.ne.s32.totalorder %s80, %s81
      %p92 = scmp.eq.s32.totalorder %s30, 0
      %p93 = por %p91, %p92
      %p94 = scmp.ne.s32.totalorder %s80, %s81
      %p95 = scmp.eq.s32.totalorder %s31, 3
      %p96 = por %p94, %p95
      %p98 = scmp.ne.s32.totalorder %s81, %s97
      %p99 = scmp.eq.s32.totalorder %s31, 0
      %p100 = por %p98, %p99
      %s101 = ssub.s32 %s32, %s44
      %p102 = scmp.eq.s32.totalorder %s101, 0
      %s104 = sadd.s32 %s103, 1
      %s105 = scalar_select %p102, %s103, %s104
      %p108 = pneg %p102
      %p109 = scmp.eq.s32.totalorder %s25, 3
      %p110 = por %p108, %p109
      %p111 = scmp.ne.s32.totalorder %s103, %s106
      %p112 = scmp.eq.s32.totalorder %s25, 0
      %p113 = por %p111, %p112
      %p114 = scmp.ne.s32.totalorder %s103, %s106
      %p115 = scmp.eq.s32.totalorder %s30, 3
      %p116 = por %p114, %p115
      %p117 = scmp.ne.s32.totalorder %s106, %s107
      %p118 = scmp.eq.s32.totalorder %s30, 0
      %p119 = por %p117, %p118
      %p120 = scmp.ne.s32.totalorder %s106, %s107
      %p121 = scmp.eq.s32.totalorder %s31, 3
      %p122 = por %p120, %p121
      %p124 = scmp.ne.s32.totalorder %s107, %s123
      %p125 = scmp.eq.s32.totalorder %s31, 0
      %p126 = por %p124, %p125
      %s127 = ssub.s32 %s32, %s44
      %p128 = scmp.eq.s32.totalorder %s127, 0
      %s130 = sadd.s32 %s129, 1
      %s131 = scalar_select %p128, %s129, %s130
      %p134 = pneg %p128
      %p135 = scmp.eq.s32.totalorder %s25, 3
      %p136 = por %p134, %p135
      %p137 = scmp.ne.s32.totalorder %s129, %s132
      %p138 = scmp.eq.s32.totalorder %s25, 0
      %p139 = por %p137, %p138
      %p140 = scmp.ne.s32.totalorder %s129, %s132
      %p141 = scmp.eq.s32.totalorder %s30, 3
      %p142 = por %p140, %p141
      %p143 = scmp.ne.s32.totalorder %s132, %s133
      %p144 = scmp.eq.s32.totalorder %s30, 0
      %p145 = por %p143, %p144
      %p146 = scmp.ne.s32.totalorder %s132, %s133
      %p147 = scmp.eq.s32.totalorder %s31, 3
      %p148 = por %p146, %p147
      %p150 = scmp.ne.s32.totalorder %s133, %s149
      %p151 = scmp.eq.s32.totalorder %s31, 0
      %p152 = por %p150, %p151
      %s154 = sadd.s32 %s153, 1
      %p157 = scmp.eq.s32.totalorder %s25, 3
      %p158 = scmp.ne.s32.totalorder %s153, %s155
      %p159 = scmp.eq.s32.totalorder %s25, 0
      %p160 = por %p158, %p159
      %p161 = scmp.ne.s32.totalorder %s153, %s155
      %p162 = scmp.eq.s32.totalorder %s30, 3
      %p163 = por %p161, %p162
      %p164 = scmp.ne.s32.totalorder %s155, %s156
      %p165 = scmp.eq.s32.totalorder %s30, 0
      %p166 = por %p164, %p165
      %p167 = scmp.ne.s32.totalorder %s155, %s156
      %p168 = scmp.eq.s32.totalorder %s31, 3
      %p169 = por %p167, %p168
      %p171 = scmp.ne.s32.totalorder %s156, %s170
      %p172 = scmp.eq.s32.totalorder %s31, 0
      %p173 = por %p171, %p172
      %s175 = sadd.s32 %s174, 1
      %p178 = scmp.eq.s32.totalorder %s25, 3
      %p179 = scmp.ne.s32.totalorder %s174, %s176
      %p180 = scmp.eq.s32.totalorder %s25, 0
      %p181 = por %p179, %p180
      %p182 = scmp.ne.s32.totalorder %s174, %s176
      %p183 = scmp.eq.s32.totalorder %s30, 3
      %p184 = por %p182, %p183
      %p185 = scmp.ne.s32.totalorder %s176, %s177
      %p186 = scmp.eq.s32.totalorder %s30, 0
      %p187 = por %p185, %p186
      %p188 = scmp.ne.s32.totalorder %s176, %s177
      %p189 = scmp.eq.s32.totalorder %s31, 3
      %p190 = por %p188, %p189
      %p192 = scmp.ne.s32.totalorder %s177, %s191
      %p193 = scmp.eq.s32.totalorder %s31, 0
      %p194 = por %p192, %p193
      %s196 = sadd.s32 %s195, 1
      %p199 = scmp.eq.s32.totalorder %s25, 3
      %p200 = scmp.ne.s32.totalorder %s195, %s197
      %p201 = scmp.eq.s32.totalorder %s25, 0
      %p202 = por %p200, %p201
      %p203 = scmp.ne.s32.totalorder %s195, %s197
      %p204 = scmp.eq.s32.totalorder %s30, 3
      %p205 = por %p203, %p204
      %p206 = scmp.ne.s32.totalorder %s197, %s198
      %p207 = scmp.eq.s32.totalorder %s30, 0
      %p208 = por %p206, %p207
      %p209 = scmp.ne.s32.totalorder %s197, %s198
      %p210 = scmp.eq.s32.totalorder %s31, 3
      %p211 = por %p209, %p210
      %p213 = scmp.ne.s32.totalorder %s198, %s212
      %p214 = scmp.eq.s32.totalorder %s31, 0
      %p215 = por %p213, %p214
      %s217 = sadd.s32 %s216, 1
      %p220 = scmp.eq.s32.totalorder %s25, 3
      %p221 = scmp.ne.s32.totalorder %s216, %s218
      %p222 = scmp.eq.s32.totalorder %s25, 0
      %p223 = por %p221, %p222
      %p224 = scmp.ne.s32.totalorder %s216, %s218
      %p225 = scmp.eq.s32.totalorder %s30, 3
      %p226 = por %p224, %p225
      %p227 = scmp.ne.s32.totalorder %s218, %s219
      %p228 = scmp.eq.s32.totalorder %s30, 0
      %p229 = por %p227, %p228
      %p230 = scmp.ne.s32.totalorder %s218, %s219
      %p231 = scmp.eq.s32.totalorder %s31, 3
      %p232 = por %p230, %p231
      %p234 = scmp.ne.s32.totalorder %s219, %s233
      %p235 = scmp.eq.s32.totalorder %s31, 0
      %p236 = por %p234, %p235
      %s238 = sadd.s32 %s237, 1
      %p241 = scmp.eq.s32.totalorder %s25, 3
      %p242 = scmp.ne.s32.totalorder %s237, %s239
      %p243 = scmp.eq.s32.totalorder %s25, 0
      %p244 = por %p242, %p243
      %p245 = scmp.ne.s32.totalorder %s237, %s239
      %p246 = scmp.eq.s32.totalorder %s30, 3
      %p247 = por %p245, %p246
      %p248 = scmp.ne.s32.totalorder %s239, %s240
      %p249 = scmp.eq.s32.totalorder %s30, 0
      %p250 = por %p248, %p249
      %p251 = scmp.ne.s32.totalorder %s239, %s240
      %p252 = scmp.eq.s32.totalorder %s31, 3
      %p253 = por %p251, %p252
      %p255 = scmp.ne.s32.totalorder %s240, %s254
      %p256 = scmp.eq.s32.totalorder %s31, 0
      %p257 = por %p255, %p256
      %s258 = ssub.s32 %s32, %s44
      %p259 = scmp.eq.s32.totalorder %s258, 0
      %s261 = sadd.s32 %s260, 1
      %s262 = scalar_select %p259, %s260, %s261
      %p265 = pneg %p259
      %p266 = scmp.eq.s32.totalorder %s25, 3
      %p267 = por %p265, %p266
      %p268 = scmp.ne.s32.totalorder %s260, %s263
      %p269 = scmp.eq.s32.totalorder %s25, 0
      %p270 = por %p268, %p269
      %p271 = scmp.ne.s32.totalorder %s260, %s263
      %p272 = scmp.eq.s32.totalorder %s30, 3
      %p273 = por %p271, %p272
      %p274 = scmp.ne.s32.totalorder %s263, %s264
      %p275 = scmp.eq.s32.totalorder %s30, 0
      %p276 = por %p274, %p275
      %p277 = scmp.ne.s32.totalorder %s263, %s264
      %p278 = scmp.eq.s32.totalorder %s31, 3
      %p279 = por %p277, %p278
      %p281 = scmp.ne.s32.totalorder %s264, %s280
      %p282 = scmp.eq.s32.totalorder %s31, 0
      %p283 = por %p281, %p282
      %p284 = scmp.le.s32.totalorder 1, %s25
      %p285 = scmp.lt.s32.totalorder %s25, 5
      %p286 = pnand %p284, %p285
      %p287 = pneg %p286
      // Predicated region
      $region9: #{tpu_custom_call.1} parent=5 // pred_check
        _
      $region10: #{tpu_custom_call.1} parent=5 // pred_check_branch
        %289 = sbr.rel (%p286) target = $region12
      $region11: #{tpu_custom_call.1} parent=5 // pred_region
        %s290 = ssub.s32 %s25, 1
        // Predicated region
        $region13: #{tpu_custom_call.1} parent=11 // pred_check
          %p291 = pneg %p166
        $region14: #{tpu_custom_call.1} parent=11 // pred_check_branch
          %293 = sbr.rel (%p291) target = $region16
        $region15: #{tpu_custom_call.1} parent=11 // pred_region
          %s295 = ssub.s32 2048, 2048
          %296 = vsyncadd [#allocation8], %s295
          %s297 = sshll.u32 [#allocation9], 4
          %s298 = int_to_ptr.vmem [resolvable:$true] %s297
          %303 = dma.hbm_to_vmem [thread:$0]  %s4, 2048, %s298, [#allocation8], 128, 128, 8
        $region16: #{tpu_custom_call.1} parent=11 // pred_fallthru
          _
        // Predicated region
        $region17: #{tpu_custom_call.1} parent=11 // pred_check
          %p304 = pneg %p187
        $region18: #{tpu_custom_call.1} parent=11 // pred_check_branch
          %306 = sbr.rel (%p304) target = $region20
        $region19: #{tpu_custom_call.1} parent=11 // pred_region
          _
        $region20: #{tpu_custom_call.1} parent=11 // pred_fallthru
          _
        // Predicated region
        $region21: #{tpu_custom_call.1} parent=11 // pred_check
          %p307 = pneg %p208
        $region22: #{tpu_custom_call.1} parent=11 // pred_check_branch
          %309 = sbr.rel (%p307) target = $region24
        $region23: #{tpu_custom_call.1} parent=11 // pred_region
          %s311 = ssub.s32 2048, 2048
          %312 = vsyncadd [#allocation11], %s311
          %s313 = sshll.u32 [#allocation10], 4
          %s314 = int_to_ptr.vmem [resolvable:$true] %s313
          %319 = dma.hbm_to_vmem [thread:$0]  %s6, 2048, %s314, [#allocation11], 128, 128, 8
        $region24: #{tpu_custom_call.1} parent=11 // pred_fallthru
          _
        // Predicated region
        $region25: #{tpu_custom_call.1} parent=11 // pred_check
          %p320 = pneg %p229
        $region26: #{tpu_custom_call.1} parent=11 // pred_check_branch
          %322 = sbr.rel (%p320) target = $region28
        $region27: #{tpu_custom_call.1} parent=11 // pred_region
          %s324 = ssub.s32 2048, 2048
          %325 = vsyncadd [#allocation11], %s324
          %s326 = sshll.u32 [#allocation12], 4
          %s327 = int_to_ptr.vmem [resolvable:$true] %s326
          %332 = dma.hbm_to_vmem [thread:$0]  %s7, 2048, %s327, [#allocation11], 128, 128, 8
        $region28: #{tpu_custom_call.1} parent=11 // pred_fallthru
          _
        // Predicated region
        $region29: #{tpu_custom_call.1} parent=11 // pred_check
          %p333 = pneg %p250
        $region30: #{tpu_custom_call.1} parent=11 // pred_check_branch
          %335 = sbr.rel (%p333) target = $region32
        $region31: #{tpu_custom_call.1} parent=11 // pred_region
          _
        $region32: #{tpu_custom_call.1} parent=11 // pred_fallthru
          _
      $region12: #{tpu_custom_call.1} parent=5 // pred_fallthru
        _
      %p336 = scmp.lt.s32.totalorder %s25, 4
      // Predicated region
      $region33: #{tpu_custom_call.1} parent=5 // pred_check
        %p337 = pneg %p336
      $region34: #{tpu_custom_call.1} parent=5 // pred_check_branch
        %339 = sbr.rel (%p337) target = $region36
      $region35: #{tpu_custom_call.1} parent=5 // pred_region
        // Predicated region
        $region37: #{tpu_custom_call.1} parent=35 // pred_check
          %p340 = pneg %p59
        $region38: #{tpu_custom_call.1} parent=35 // pred_check_branch
          %342 = sbr.rel (%p340) target = $region40
        $region39: #{tpu_custom_call.1} parent=35 // pred_region
          #allocation15 [shape = 'u32[6]{0}', space=smem, size = 0x18, scoped, tag = 'DMA stride descriptor']
          %s343 = sand.u32 %s49, 1
          %s344 = scalar_lea.sflag [#allocation5], %s343
          %s345 = sand.u32 %s49, 1
          %s346 = smul.addr %s345, 512
          %s347 = scalar_lea.vmem [#allocation4], %s346
          %s348 = smul.u32 8, %s32
          %s349 = smul.u32 16, %s33
          %s351 = ssub.s32 8192, 8192
          %352 = vsyncadd %s344, %s351
          %s353 = smul.addr %s348, 32
          %s354 = sadd.s32 %s349, %s353
          %s355 = smul.addr %s354, 64
          %s356 = scalar_lea.hbm %s0, %s355
          %s358 = sshll.u32 1, 14
          %s359 = sxor.u32 4294967295, %s358
          %s361 = sld [smem:[#allocation0]]
          %s362 = sadd.s32 2, %s361
          %s364 = sshll.u32 7, 26
          %s365 = sxor.u32 4294967295, %s364
          %s366 = sand.u32 0, %s365
          %s367 = sshll.u32 %s362, 26
          %s368 = sor.u32 %s366, %s367
          %s369 = sshll.u32 %s347, 4
          %s370 = int_to_ptr.vmem [resolvable:$true] %s369
          %376 = sst [smem:[#allocation15]] 2048
          %s377 = scalar_lea.smem [#allocation15], 1
          %378 = sst [smem:[%s377]] 1024
          %s379 = scalar_lea.smem [#allocation15], 2
          %380 = sst [smem:[%s379]] 16
          %s381 = scalar_lea.smem [#allocation15], 3
          %382 = sst [smem:[%s381]] 64
          %s383 = scalar_lea.smem [#allocation15], 4
          %384 = sst [smem:[%s383]] 64
          %s385 = scalar_lea.smem [#allocation15], 5
          %386 = sst [smem:[%s385]] 4
          %388 = dma.general %s356, 8192, %s370, %s344, 131072, [#allocation15], %s368, 0
        $region40: #{tpu_custom_call.1} parent=35 // pred_fallthru
          _
        // Predicated region
        $region41: #{tpu_custom_call.1} parent=35 // pred_check
          %p389 = pneg %p87
        $region42: #{tpu_custom_call.1} parent=35 // pred_check_branch
          %391 = sbr.rel (%p389) target = $region44
        $region43: #{tpu_custom_call.1} parent=35 // pred_region
          %s392 = sand.u32 %s25, 1
          %s393 = scalar_lea.sflag [#allocation8], %s392
          %s394 = sand.u32 %s77, 1
          %s395 = smul.addr %s394, 8
          %s396 = scalar_lea.vmem [#allocation7], %s395
          %s398 = ssub.s32 128, 128
          %399 = vsyncadd %s393, %s398
          %s400 = smul.addr %s32, 2
          %s401 = sadd.s32 %s33, %s400
          %s402 = smul.addr %s401, 128
          %s403 = scalar_lea.hbm %s1, %s402
          %s405 = sshll.u32 %s396, 4
          %s406 = int_to_ptr.vmem [resolvable:$true] %s405
          %408 = dma.hbm_to_vmem [thread:$0]  %s403, 128, %s406, %s393
        $region44: #{tpu_custom_call.1} parent=35 // pred_fallthru
          _
        // Predicated region
        $region45: #{tpu_custom_call.1} parent=35 // pred_check
          %p409 = pneg %p113
        $region46: #{tpu_custom_call.1} parent=35 // pred_check_branch
          %411 = sbr.rel (%p409) target = $region48
        $region47: #{tpu_custom_call.1} parent=35 // pred_region
          %p412 = scmp.lt.s32.totalorder %s32, 1
          %s413 = scalar_select %p412, %s32, 1
          %s414 = smul.addr %s413, 4
          %s415 = scalar_lea.vmem %s2, %s414
        $region48: #{tpu_custom_call.1} parent=35 // pred_fallthru
          _
        // Predicated region
        $region49: #{tpu_custom_call.1} parent=35 // pred_check
          %p416 = pneg %p139
        $region50: #{tpu_custom_call.1} parent=35 // pred_check_branch
          %418 = sbr.rel (%p416) target = $region52
        $region51: #{tpu_custom_call.1} parent=35 // pred_region
          %p419 = scmp.lt.s32.totalorder %s32, 1
          %s420 = scalar_select %p419, %s32, 1
          %s421 = smul.addr %s420, 8
          %s422 = scalar_lea.vmem %s3, %s421
        $region52: #{tpu_custom_call.1} parent=35 // pred_fallthru
          _
      $region36: #{tpu_custom_call.1} parent=5 // pred_fallthru
        _
      %p423 = scmp.le.s32.totalorder 1, %s25
      %p424 = scmp.lt.s32.totalorder %s25, 5
      %p425 = pnand %p423, %p424
      %p426 = pneg %p425
      // Predicated region
      $region53: #{tpu_custom_call.1} parent=5 // pred_check
        _
      $region54: #{tpu_custom_call.1} parent=5 // pred_check_branch
        %428 = sbr.rel (%p425) target = $region56
      $region55: #{tpu_custom_call.1} parent=5 // pred_region
        %s429 = ssub.s32 %s25, 1
        %s430 = sand.u32 %s52, 1
        %s431 = scalar_lea.sflag [#allocation5], %s430
        %s432 = sand.u32 %s52, 1
        %s433 = smul.addr %s432, 512
        %s434 = scalar_lea.vmem [#allocation4], %s433
        // Predicated region
        $region57: #{tpu_custom_call.1} parent=55 // pred_check
          %p435 = pneg %p65
        $region58: #{tpu_custom_call.1} parent=55 // pred_check_branch
          %437 = sbr.rel (%p435) target = $region60
        $region59: #{tpu_custom_call.1} parent=55 // pred_region
          %438 = dma.done %s431, 8192
        $region60: #{tpu_custom_call.1} parent=55 // pred_fallthru
          _
        %s439 = sand.u32 %s30, 1
        %s440 = scalar_lea.sflag [#allocation8], %s439
        %s441 = sand.u32 %s80, 1
        %s442 = smul.addr %s441, 8
        %s443 = scalar_lea.vmem [#allocation7], %s442
        // Predicated region
        $region61: #{tpu_custom_call.1} parent=55 // pred_check
          %p444 = pneg %p93
        $region62: #{tpu_custom_call.1} parent=55 // pred_check_branch
          %446 = sbr.rel (%p444) target = $region64
        $region63: #{tpu_custom_call.1} parent=55 // pred_region
          %447 = dma.done %s440, 128
        $region64: #{tpu_custom_call.1} parent=55 // pred_fallthru
          _
        // Predicated region
        $region65: #{tpu_custom_call.1} parent=55 // pred_check
          %p448 = pneg %p166
        $region66: #{tpu_custom_call.1} parent=55 // pred_check_branch
          %450 = sbr.rel (%p448) target = $region68
        $region67: #{tpu_custom_call.1} parent=55 // pred_region
          %451 = dma.done [#allocation8], 2048
        $region68: #{tpu_custom_call.1} parent=55 // pred_fallthru
          _
        // Predicated region
        $region69: #{tpu_custom_call.1} parent=55 // pred_check
          %p452 = pneg %p208
        $region70: #{tpu_custom_call.1} parent=55 // pred_check_branch
          %454 = sbr.rel (%p452) target = $region72
        $region71: #{tpu_custom_call.1} parent=55 // pred_region
          %455 = dma.done [#allocation11], 2048
        $region72: #{tpu_custom_call.1} parent=55 // pred_fallthru
          _
        // Predicated region
        $region73: #{tpu_custom_call.1} parent=55 // pred_check
          %p456 = pneg %p229
        $region74: #{tpu_custom_call.1} parent=55 // pred_check_branch
          %458 = sbr.rel (%p456) target = $region76
        $region75: #{tpu_custom_call.1} parent=55 // pred_region
          %459 = dma.done [#allocation11], 2048
        $region76: #{tpu_custom_call.1} parent=55 // pred_fallthru
          _
        %s460 = sand.u32 %s52, 1
        %s461 = scalar_lea.sflag [#allocation5], %s460
        %s462 = sand.u32 %s52, 1
        %s463 = smul.addr %s462, 512
        %s464 = scalar_lea.vmem [#allocation4], %s463
        %p465 = pneg %p65
        %p466 = pneg %p62
        %s467 = sand.u32 %s30, 1
        %s468 = scalar_lea.sflag [#allocation8], %s467
        %s469 = sand.u32 %s80, 1
        %s470 = smul.addr %s469, 8
        %s471 = scalar_lea.vmem [#allocation7], %s470
        %p472 = pneg %p93
        %p473 = pneg %p90
        %p474 = scmp.lt.s32.totalorder %s34, 1
        %s475 = scalar_select %p474, %s34, 1
        %s476 = smul.addr %s475, 4
        %s477 = scalar_lea.vmem %s2, %s476
        %p478 = pneg %p119
        %p479 = pneg %p116
        %p480 = scmp.lt.s32.totalorder %s34, 1
        %s481 = scalar_select %p480, %s34, 1
        %s482 = smul.addr %s481, 8
        %s483 = scalar_lea.vmem %s3, %s482
        %p484 = pneg %p145
        %p485 = pneg %p142
        %p486 = pneg %p166
        %p487 = pneg %p163
        %p488 = pneg %p187
        %p489 = pneg %p184
        %p490 = pneg %p208
        %p491 = pneg %p205
        %p492 = pneg %p229
        %p493 = pneg %p226
        %p494 = pneg %p250
        %p495 = pneg %p247
        %p496 = pneg %p276
        %p497 = pneg %p273
        %s498 = sand.u32 %s263, 1
        %s499 = scalar_lea.sflag [#allocation6], %s498
        %s500 = sand.u32 %s263, 1
        %s501 = smul.addr %s500, 8
        %s502 = scalar_lea.vmem [#allocation13], %s501
        %s503 = smul.u32 8, %s34
        %s504 = smul.u32 16, %s35
        %p505 = scmp.lt.s32.totalorder %s34, 1
        %s506 = scalar_select %p505, %s34, 1
        %s507 = smul.addr %s506, 4
        %s508 = scalar_lea.vmem %s2, %s507
        %p509 = scmp.lt.s32.totalorder %s34, 1
        %s510 = scalar_select %p509, %s34, 1
        %s511 = smul.addr %s510, 8
        %s512 = scalar_lea.vmem %s3, %s511
        %p514 = scmp.eq.s32.totalorder %s35, 0
        // Predicated region
        $region77: #{tpu_custom_call.1} parent=55 // pred_check
          %p515 = pneg %p514
        $region78: #{tpu_custom_call.1} parent=55 // pred_check_branch
          %517 = sbr.rel (%p515) target = $region80
        $region79: #{tpu_custom_call.1} parent=55 // pred_region
          %518 = vst [vmem:[#allocation2] sm:$0xff] 0.0
          %519 = vst [vmem:[#allocation3] sm:$0xff] 0.0
          %520 = vst [vmem:[#allocation3 + $0x8] sm:$0xff] 0.0
          %521 = vst [vmem:[#allocation3 + $0x10] sm:$0xff] 0.0
          %522 = vst [vmem:[#allocation3 + $0x18] sm:$0xff] 0.0
          %523 = vst [vmem:[#allocation3 + $0x20] sm:$0xff] 0.0
          %524 = vst [vmem:[#allocation3 + $0x28] sm:$0xff] 0.0
          %525 = vst [vmem:[#allocation3 + $0x30] sm:$0xff] 0.0
          %526 = vst [vmem:[#allocation3 + $0x38] sm:$0xff] 0.0
        $region80: #{tpu_custom_call.1} parent=55 // pred_fallthru
          _
        %v527 = vld [vmem:[%s443] sm:$0xff]
        %528 = vst [vmem:[#allocation3] sm:$0x1] %v527
        %v530 = vrot.slane %v527, 1
        %532 = vst [vmem:[#allocation3 + $0x9] sm:$0x1] %v530
        %v533 = vrot.slane %v527, 2
        %535 = vst [vmem:[#allocation3 + $0x12] sm:$0x1] %v533
        %v536 = vrot.slane %v527, 3
        %538 = vst [vmem:[#allocation3 + $0x1b] sm:$0x1] %v536
        %v539 = vrot.slane %v527, 4
        %541 = vst [vmem:[#allocation3 + $0x24] sm:$0x1] %v539
        %v542 = vrot.slane %v527, 5
        %544 = vst [vmem:[#allocation3 + $0x2d] sm:$0x1] %v542
        %v545 = vrot.slane %v527, 6
        %547 = vst [vmem:[#allocation3 + $0x36] sm:$0x1] %v545
        %v548 = vrot.slane %v527, 7
        %550 = vst [vmem:[#allocation3 + $0x3f] sm:$0x1] %v548
        %v551 = vld [vmem:[%s434] sm:$0xf]
        %v552 = vld [vmem:[%s434 + $0x4] sm:$0xf]
        %v553 = vld [vmem:[%s434 + $0x8] sm:$0xf]
        %v554 = vld [vmem:[%s434 + $0xc] sm:$0xf]
        %v555 = vld [vmem:[%s434 + $0x10] sm:$0xf]
        %v556 = vld [vmem:[%s434 + $0x14] sm:$0xf]
        %v557 = vld [vmem:[%s434 + $0x18] sm:$0xf]
        %v558 = vld [vmem:[%s434 + $0x1c] sm:$0xf]
        %v559 = vld [vmem:[%s434 + $0x20] sm:$0xf]
        %v560 = vld [vmem:[%s434 + $0x24] sm:$0xf]
        %v561 = vld [vmem:[%s434 + $0x28] sm:$0xf]
        %v562 = vld [vmem:[%s434 + $0x2c] sm:$0xf]
        %v563 = vld [vmem:[%s434 + $0x30] sm:$0xf]
        %v564 = vld [vmem:[%s434 + $0x34] sm:$0xf]
        %v565 = vld [vmem:[%s434 + $0x38] sm:$0xf]
        %v566 = vld [vmem:[%s434 + $0x3c] sm:$0xf]
        %v567 = vld [vmem:[%s434 + $0x40] sm:$0xf]
        %v568 = vld [vmem:[%s434 + $0x44] sm:$0xf]
        %v569 = vld [vmem:[%s434 + $0x48] sm:$0xf]
        %v570 = vld [vmem:[%s434 + $0x4c] sm:$0xf]
        %v571 = vld [vmem:[%s434 + $0x50] sm:$0xf]
        %v572 = vld [vmem:[%s434 + $0x54] sm:$0xf]
        %v573 = vld [vmem:[%s434 + $0x58] sm:$0xf]
        %v574 = vld [vmem:[%s434 + $0x5c] sm:$0xf]
        %v575 = vld [vmem:[%s434 + $0x60] sm:$0xf]
        %v576 = vld [vmem:[%s434 + $0x64] sm:$0xf]
        %v577 = vld [vmem:[%s434 + $0x68] sm:$0xf]
        %v578 = vld [vmem:[%s434 + $0x6c] sm:$0xf]
        %v579 = vld [vmem:[%s434 + $0x70] sm:$0xf]
        %v580 = vld [vmem:[%s434 + $0x74] sm:$0xf]
        %v581 = vld [vmem:[%s434 + $0x78] sm:$0xf]
        %v582 = vld [vmem:[%s434 + $0x7c] sm:$0xf]
        %v583 = vld [vmem:[%s434 + $0x80] sm:$0xf]
        %v584 = vld [vmem:[%s434 + $0x84] sm:$0xf]
        %v585 = vld [vmem:[%s434 + $0x88] sm:$0xf]
        %v586 = vld [vmem:[%s434 + $0x8c] sm:$0xf]
        %v587 = vld [vmem:[%s434 + $0x90] sm:$0xf]
        %v588 = vld [vmem:[%s434 + $0x94] sm:$0xf]
        %v589 = vld [vmem:[%s434 + $0x98] sm:$0xf]
        %v590 = vld [vmem:[%s434 + $0x9c] sm:$0xf]
        %v591 = vld [vmem:[%s434 + $0xa0] sm:$0xf]
        %v592 = vld [vmem:[%s434 + $0xa4] sm:$0xf]
        %v593 = vld [vmem:[%s434 + $0xa8] sm:$0xf]
        %v594 = vld [vmem:[%s434 + $0xac] sm:$0xf]
        %v595 = vld [vmem:[%s434 + $0xb0] sm:$0xf]
        %v596 = vld [vmem:[%s434 + $0xb4] sm:$0xf]
        %v597 = vld [vmem:[%s434 + $0xb8] sm:$0xf]
        %v598 = vld [vmem:[%s434 + $0xbc] sm:$0xf]
        %v599 = vld [vmem:[%s434 + $0xc0] sm:$0xf]
        %v600 = vld [vmem:[%s434 + $0xc4] sm:$0xf]
        %v601 = vld [vmem:[%s434 + $0xc8] sm:$0xf]
        %v602 = vld [vmem:[%s434 + $0xcc] sm:$0xf]
        %v603 = vld [vmem:[%s434 + $0xd0] sm:$0xf]
        %v604 = vld [vmem:[%s434 + $0xd4] sm:$0xf]
        %v605 = vld [vmem:[%s434 + $0xd8] sm:$0xf]
        %v606 = vld [vmem:[%s434 + $0xdc] sm:$0xf]
        %v607 = vld [vmem:[%s434 + $0xe0] sm:$0xf]
        %v608 = vld [vmem:[%s434 + $0xe4] sm:$0xf]
        %v609 = vld [vmem:[%s434 + $0xe8] sm:$0xf]
        %v610 = vld [vmem:[%s434 + $0xec] sm:$0xf]
        %v611 = vld [vmem:[%s434 + $0xf0] sm:$0xf]
        %v612 = vld [vmem:[%s434 + $0xf4] sm:$0xf]
        %v613 = vld [vmem:[%s434 + $0xf8] sm:$0xf]
        %v614 = vld [vmem:[%s434 + $0xfc] sm:$0xf]
        %v615 = vld [vmem:[%s434 + $0x100] sm:$0xf]
        %v616 = vld [vmem:[%s434 + $0x104] sm:$0xf]
        %v617 = vld [vmem:[%s434 + $0x108] sm:$0xf]
        %v618 = vld [vmem:[%s434 + $0x10c] sm:$0xf]
        %v619 = vld [vmem:[%s434 + $0x110] sm:$0xf]
        %v620 = vld [vmem:[%s434 + $0x114] sm:$0xf]
        %v621 = vld [vmem:[%s434 + $0x118] sm:$0xf]
        %v622 = vld [vmem:[%s434 + $0x11c] sm:$0xf]
        %v623 = vld [vmem:[%s434 + $0x120] sm:$0xf]
        %v624 = vld [vmem:[%s434 + $0x124] sm:$0xf]
        %v625 = vld [vmem:[%s434 + $0x128] sm:$0xf]
        %v626 = vld [vmem:[%s434 + $0x12c] sm:$0xf]
        %v627 = vld [vmem:[%s434 + $0x130] sm:$0xf]
        %v628 = vld [vmem:[%s434 + $0x134] sm:$0xf]
        %v629 = vld [vmem:[%s434 + $0x138] sm:$0xf]
        %v630 = vld [vmem:[%s434 + $0x13c] sm:$0xf]
        %v631 = vld [vmem:[%s434 + $0x140] sm:$0xf]
        %v632 = vld [vmem:[%s434 + $0x144] sm:$0xf]
        %v633 = vld [vmem:[%s434 + $0x148] sm:$0xf]
        %v634 = vld [vmem:[%s434 + $0x14c] sm:$0xf]
        %v635 = vld [vmem:[%s434 + $0x150] sm:$0xf]
        %v636 = vld [vmem:[%s434 + $0x154] sm:$0xf]
        %v637 = vld [vmem:[%s434 + $0x158] sm:$0xf]
        %v638 = vld [vmem:[%s434 + $0x15c] sm:$0xf]
        %v639 = vld [vmem:[%s434 + $0x160] sm:$0xf]
        %v640 = vld [vmem:[%s434 + $0x164] sm:$0xf]
        %v641 = vld [vmem:[%s434 + $0x168] sm:$0xf]
        %v642 = vld [vmem:[%s434 + $0x16c] sm:$0xf]
        %v643 = vld [vmem:[%s434 + $0x170] sm:$0xf]
        %v644 = vld [vmem:[%s434 + $0x174] sm:$0xf]
        %v645 = vld [vmem:[%s434 + $0x178] sm:$0xf]
        %v646 = vld [vmem:[%s434 + $0x17c] sm:$0xf]
        %v647 = vld [vmem:[%s434 + $0x180] sm:$0xf]
        %v648 = vld [vmem:[%s434 + $0x184] sm:$0xf]
        %v649 = vld [vmem:[%s434 + $0x188] sm:$0xf]
        %v650 = vld [vmem:[%s434 + $0x18c] sm:$0xf]
        %v651 = vld [vmem:[%s434 + $0x190] sm:$0xf]
        %v652 = vld [vmem:[%s434 + $0x194] sm:$0xf]
        %v653 = vld [vmem:[%s434 + $0x198] sm:$0xf]
        %v654 = vld [vmem:[%s434 + $0x19c] sm:$0xf]
        %v655 = vld [vmem:[%s434 + $0x1a0] sm:$0xf]
        %v656 = vld [vmem:[%s434 + $0x1a4] sm:$0xf]
        %v657 = vld [vmem:[%s434 + $0x1a8] sm:$0xf]
        %v658 = vld [vmem:[%s434 + $0x1ac] sm:$0xf]
        %v659 = vld [vmem:[%s434 + $0x1b0] sm:$0xf]
        %v660 = vld [vmem:[%s434 + $0x1b4] sm:$0xf]
        %v661 = vld [vmem:[%s434 + $0x1b8] sm:$0xf]
        %v662 = vld [vmem:[%s434 + $0x1bc] sm:$0xf]
        %v663 = vld [vmem:[%s434 + $0x1c0] sm:$0xf]
        %v664 = vld [vmem:[%s434 + $0x1c4] sm:$0xf]
        %v665 = vld [vmem:[%s434 + $0x1c8] sm:$0xf]
        %v666 = vld [vmem:[%s434 + $0x1cc] sm:$0xf]
        %v667 = vld [vmem:[%s434 + $0x1d0] sm:$0xf]
        %v668 = vld [vmem:[%s434 + $0x1d4] sm:$0xf]
        %v669 = vld [vmem:[%s434 + $0x1d8] sm:$0xf]
        %v670 = vld [vmem:[%s434 + $0x1dc] sm:$0xf]
        %v671 = vld [vmem:[%s434 + $0x1e0] sm:$0xf]
        %v672 = vld [vmem:[%s434 + $0x1e4] sm:$0xf]
        %v673 = vld [vmem:[%s434 + $0x1e8] sm:$0xf]
        %v674 = vld [vmem:[%s434 + $0x1ec] sm:$0xf]
        %v675 = vld [vmem:[%s434 + $0x1f0] sm:$0xf]
        %v676 = vld [vmem:[%s434 + $0x1f4] sm:$0xf]
        %v677 = vld [vmem:[%s434 + $0x1f8] sm:$0xf]
        %v678 = vld [vmem:[%s434 + $0x1fc] sm:$0xf]
        %v679 = vld [vmem:[#allocation2] sm:$0xff]
        %v680 = vld [vmem:[#allocation3] sm:$0xff]
        %v681 = vld [vmem:[#allocation3 + $0x8] sm:$0xff]
        %v682 = vld [vmem:[#allocation3 + $0x10] sm:$0xff]
        %v683 = vld [vmem:[#allocation3 + $0x18] sm:$0xff]
        %v684 = vld [vmem:[#allocation3 + $0x20] sm:$0xff]
        %v685 = vld [vmem:[#allocation3 + $0x28] sm:$0xff]
        %v686 = vld [vmem:[#allocation3 + $0x30] sm:$0xff]
        %v687 = vld [vmem:[#allocation3 + $0x38] sm:$0xff]
        %v688 = vpack.c.bf16 %v680, %v680
        %v689 = vpack.c.bf16 %v681, %v681
        %v690 = vpack.c.bf16 %v682, %v682
        %v691 = vpack.c.bf16 %v683, %v683
        %v692 = vpack.c.bf16 %v684, %v684
        %v693 = vpack.c.bf16 %v685, %v685
        %v694 = vpack.c.bf16 %v686, %v686
        %v695 = vpack.c.bf16 %v687, %v687
        %v824 = vunpack.c.l.b16 %v551
        %v825 = vunpack.c.l.b16 %v552
        %v826 = vunpack.c.l.b16 %v553
        %v827 = vunpack.c.l.b16 %v554
        %v828 = vunpack.c.l.b16 %v555
        %v829 = vunpack.c.l.b16 %v556
        %v830 = vunpack.c.l.b16 %v557
        %v831 = vunpack.c.l.b16 %v558
        %v832 = vunpack.c.l.b16 %v559
        %v833 = vunpack.c.l.b16 %v560
        %v834 = vunpack.c.l.b16 %v561
        %v835 = vunpack.c.l.b16 %v562
        %v836 = vunpack.c.l.b16 %v563
        %v837 = vunpack.c.l.b16 %v564
        %v838 = vunpack.c.l.b16 %v565
        %v839 = vunpack.c.l.b16 %v566
        %v840 = vunpack.c.l.b16 %v567
        %v841 = vunpack.c.l.b16 %v568
        %v842 = vunpack.c.l.b16 %v569
        %v843 = vunpack.c.l.b16 %v570
        %v844 = vunpack.c.l.b16 %v571
        %v845 = vunpack.c.l.b16 %v572
        %v846 = vunpack.c.l.b16 %v573
        %v847 = vunpack.c.l.b16 %v574
        %v848 = vunpack.c.l.b16 %v575
        %v849 = vunpack.c.l.b16 %v576
        %v850 = vunpack.c.l.b16 %v577
        %v851 = vunpack.c.l.b16 %v578
        %v852 = vunpack.c.l.b16 %v579
        %v853 = vunpack.c.l.b16 %v580
        %v854 = vunpack.c.l.b16 %v581
        %v855 = vunpack.c.l.b16 %v582
        %v856 = vunpack.c.l.b16 %v583
        %v857 = vunpack.c.l.b16 %v584
        %v858 = vunpack.c.l.b16 %v585
        %v859 = vunpack.c.l.b16 %v586
        %v860 = vunpack.c.l.b16 %v587
        %v861 = vunpack.c.l.b16 %v588
        %v862 = vunpack.c.l.b16 %v589
        %v863 = vunpack.c.l.b16 %v590
        %v864 = vunpack.c.l.b16 %v591
        %v865 = vunpack.c.l.b16 %v592
        %v866 = vunpack.c.l.b16 %v593
        %v867 = vunpack.c.l.b16 %v594
        %v868 = vunpack.c.l.b16 %v595
        %v869 = vunpack.c.l.b16 %v596
        %v870 = vunpack.c.l.b16 %v597
        %v871 = vunpack.c.l.b16 %v598
        %v872 = vunpack.c.l.b16 %v599
        %v873 = vunpack.c.l.b16 %v600
        %v874 = vunpack.c.l.b16 %v601
        %v875 = vunpack.c.l.b16 %v602
        %v876 = vunpack.c.l.b16 %v603
        %v877 = vunpack.c.l.b16 %v604
        %v878 = vunpack.c.l.b16 %v605
        %v879 = vunpack.c.l.b16 %v606
        %v880 = vunpack.c.l.b16 %v607
        %v881 = vunpack.c.l.b16 %v608
        %v882 = vunpack.c.l.b16 %v609
        %v883 = vunpack.c.l.b16 %v610
        %v884 = vunpack.c.l.b16 %v611
        %v885 = vunpack.c.l.b16 %v612
        %v886 = vunpack.c.l.b16 %v613
        %v887 = vunpack.c.l.b16 %v614
        %v888 = vunpack.c.l.b16 %v615
        %v889 = vunpack.c.l.b16 %v616
        %v890 = vunpack.c.l.b16 %v617
        %v891 = vunpack.c.l.b16 %v618
        %v892 = vunpack.c.l.b16 %v619
        %v893 = vunpack.c.l.b16 %v620
        %v894 = vunpack.c.l.b16 %v621
        %v895 = vunpack.c.l.b16 %v622
        %v896 = vunpack.c.l.b16 %v623
        %v897 = vunpack.c.l.b16 %v624
        %v898 = vunpack.c.l.b16 %v625
        %v899 = vunpack.c.l.b16 %v626
        %v900 = vunpack.c.l.b16 %v627
        %v901 = vunpack.c.l.b16 %v628
        %v902 = vunpack.c.l.b16 %v629
        %v903 = vunpack.c.l.b16 %v630
        %v904 = vunpack.c.l.b16 %v631
        %v905 = vunpack.c.l.b16 %v632
        %v906 = vunpack.c.l.b16 %v633
        %v907 = vunpack.c.l.b16 %v634
        %v908 = vunpack.c.l.b16 %v635
        %v909 = vunpack.c.l.b16 %v636
        %v910 = vunpack.c.l.b16 %v637
        %v911 = vunpack.c.l.b16 %v638
        %v912 = vunpack.c.l.b16 %v639
        %v913 = vunpack.c.l.b16 %v640
        %v914 = vunpack.c.l.b16 %v641
        %v915 = vunpack.c.l.b16 %v642
        %v916 = vunpack.c.l.b16 %v643
        %v917 = vunpack.c.l.b16 %v644
        %v918 = vunpack.c.l.b16 %v645
        %v919 = vunpack.c.l.b16 %v646
        %v920 = vunpack.c.l.b16 %v647
        %v921 = vunpack.c.l.b16 %v648
        %v922 = vunpack.c.l.b16 %v649
        %v923 = vunpack.c.l.b16 %v650
        %v924 = vunpack.c.l.b16 %v651
        %v925 = vunpack.c.l.b16 %v652
        %v926 = vunpack.c.l.b16 %v653
        %v927 = vunpack.c.l.b16 %v654
        %v928 = vunpack.c.l.b16 %v655
        %v929 = vunpack.c.l.b16 %v656
        %v930 = vunpack.c.l.b16 %v657
        %v931 = vunpack.c.l.b16 %v658
        %v932 = vunpack.c.l.b16 %v659
        %v933 = vunpack.c.l.b16 %v660
        %v934 = vunpack.c.l.b16 %v661
        %v935 = vunpack.c.l.b16 %v662
        %v936 = vunpack.c.l.b16 %v663
        %v937 = vunpack.c.l.b16 %v664
        %v938 = vunpack.c.l.b16 %v665
        %v939 = vunpack.c.l.b16 %v666
        %v940 = vunpack.c.l.b16 %v667
        %v941 = vunpack.c.l.b16 %v668
        %v942 = vunpack.c.l.b16 %v669
        %v943 = vunpack.c.l.b16 %v670
        %v944 = vunpack.c.l.b16 %v671
        %v945 = vunpack.c.l.b16 %v672
        %v946 = vunpack.c.l.b16 %v673
        %v947 = vunpack.c.l.b16 %v674
        %v948 = vunpack.c.l.b16 %v675
        %v949 = vunpack.c.l.b16 %v676
        %v950 = vunpack.c.l.b16 %v677
        %v951 = vunpack.c.l.b16 %v678
        %v952 = vpack.c.b16 %v825, %v824
        %v953 = vpack.c.b16 %v827, %v826
        %v954 = vpack.c.b16 %v829, %v828
        %v955 = vpack.c.b16 %v831, %v830
        %v956 = vpack.c.b16 %v833, %v832
        %v957 = vpack.c.b16 %v835, %v834
        %v958 = vpack.c.b16 %v837, %v836
        %v959 = vpack.c.b16 %v839, %v838
        %v960 = vpack.c.b16 %v841, %v840
        %v961 = vpack.c.b16 %v843, %v842
        %v962 = vpack.c.b16 %v845, %v844
        %v963 = vpack.c.b16 %v847, %v846
        %v964 = vpack.c.b16 %v849, %v848
        %v965 = vpack.c.b16 %v851, %v850
        %v966 = vpack.c.b16 %v853, %v852
        %v967 = vpack.c.b16 %v855, %v854
        %v968 = vpack.c.b16 %v857, %v856
        %v969 = vpack.c.b16 %v859, %v858
        %v970 = vpack.c.b16 %v861, %v860
        %v971 = vpack.c.b16 %v863, %v862
        %v972 = vpack.c.b16 %v865, %v864
        %v973 = vpack.c.b16 %v867, %v866
        %v974 = vpack.c.b16 %v869, %v868
        %v975 = vpack.c.b16 %v871, %v870
        %v976 = vpack.c.b16 %v873, %v872
        %v977 = vpack.c.b16 %v875, %v874
        %v978 = vpack.c.b16 %v877, %v876
        %v979 = vpack.c.b16 %v879, %v878
        %v980 = vpack.c.b16 %v881, %v880
        %v981 = vpack.c.b16 %v883, %v882
        %v982 = vpack.c.b16 %v885, %v884
        %v983 = vpack.c.b16 %v887, %v886
        %v984 = vpack.c.b16 %v889, %v888
        %v985 = vpack.c.b16 %v891, %v890
        %v986 = vpack.c.b16 %v893, %v892
        %v987 = vpack.c.b16 %v895, %v894
        %v988 = vpack.c.b16 %v897, %v896
        %v989 = vpack.c.b16 %v899, %v898
        %v990 = vpack.c.b16 %v901, %v900
        %v991 = vpack.c.b16 %v903, %v902
        %v992 = vpack.c.b16 %v905, %v904
        %v993 = vpack.c.b16 %v907, %v906
        %v994 = vpack.c.b16 %v909, %v908
        %v995 = vpack.c.b16 %v911, %v910
        %v996 = vpack.c.b16 %v913, %v912
        %v997 = vpack.c.b16 %v915, %v914
        %v998 = vpack.c.b16 %v917, %v916
        %v999 = vpack.c.b16 %v919, %v918
        %v1000 = vpack.c.b16 %v921, %v920
        %v1001 = vpack.c.b16 %v923, %v922
        %v1002 = vpack.c.b16 %v925, %v924
        %v1003 = vpack.c.b16 %v927, %v926
        %v1004 = vpack.c.b16 %v929, %v928
        %v1005 = vpack.c.b16 %v931, %v930
        %v1006 = vpack.c.b16 %v933, %v932
        %v1007 = vpack.c.b16 %v935, %v934
        %v1008 = vpack.c.b16 %v937, %v936
        %v1009 = vpack.c.b16 %v939, %v938
        %v1010 = vpack.c.b16 %v941, %v940
        %v1011 = vpack.c.b16 %v943, %v942
        %v1012 = vpack.c.b16 %v945, %v944
        %v1013 = vpack.c.b16 %v947, %v946
        %v1014 = vpack.c.b16 %v949, %v948
        %v1015 = vpack.c.b16 %v951, %v950
        %1080 = vmatprep.subr.bf16.mxu0 0
        %1081 = vmatpush1.bf16.msra.mxu0 %v959
        %1082 = vmatprep.subr.bf16.mxu0 0
        %1083 = vmatpush1.bf16.msra.mxu0 %v958
        %1084 = vmatprep.subr.bf16.mxu0 0
        %1085 = vmatpush1.bf16.msra.mxu0 %v957
        %1086 = vmatprep.subr.bf16.mxu0 0
        %1087 = vmatpush1.bf16.msra.mxu0 %v956
        %1088 = vmatprep.subr.bf16.mxu0 0
        %1089 = vmatpush1.bf16.msra.mxu0 %v955
        %1090 = vmatprep.subr.bf16.mxu0 0
        %1091 = vmatpush1.bf16.msra.mxu0 %v954
        %1092 = vmatprep.subr.bf16.mxu0 0
        %1093 = vmatpush1.bf16.msra.mxu0 %v953
        %1094 = vmatprep.subr.bf16.mxu0 0
        %1095 = vmatpush1.bf16.msra.mxu0 %v952
        %1096 = vmatprep.subr.bf16.mxu0 0
        %1097 = vmatpush2.bf16.msra.mxu0 %v967
        %1098 = vmatprep.subr.bf16.mxu0 0
        %1099 = vmatpush2.bf16.msra.mxu0 %v966
        %1100 = vmatprep.subr.bf16.mxu0 0
        %1101 = vmatpush2.bf16.msra.mxu0 %v965
        %1102 = vmatprep.subr.bf16.mxu0 0
        %1103 = vmatpush2.bf16.msra.mxu0 %v964
        %1104 = vmatprep.subr.bf16.mxu0 0
        %1105 = vmatpush2.bf16.msra.mxu0 %v963
        %1106 = vmatprep.subr.bf16.mxu0 0
        %1107 = vmatpush2.bf16.msra.mxu0 %v962
        %1108 = vmatprep.subr.bf16.mxu0 0
        %1109 = vmatpush2.bf16.msra.mxu0 %v961
        %1110 = vmatprep.subr.bf16.mxu0 0
        %1111 = vmatpush2.bf16.msra.mxu0 %v960
        %1112 = vmatprep.mubr.bf16.mxu0 %v689
        %1113 = vmatmul.mubr.bf16.gmra.mxu0 %v688
        %v1114 = vpop.f32.mrf.mxu0
        %v1115 = vadd.f32 0.0, %v1114
        %v1116 = vpop.f32.mrf.mxu0
        %v1117 = vpop.f32.mrf.mxu0
        %v1118 = vpop.f32.mrf.mxu0
        %1119 = vdwg.mxu0
        %1120 = vmatprep.subr.bf16.mxu0 0
        %1121 = vmatpush1.bf16.msra.mxu0 %v975
        %1122 = vmatprep.subr.bf16.mxu0 0
        %1123 = vmatpush1.bf16.msra.mxu0 %v974
        %1124 = vmatprep.subr.bf16.mxu0 0
        %1125 = vmatpush1.bf16.msra.mxu0 %v973
        %1126 = vmatprep.subr.bf16.mxu0 0
        %1127 = vmatpush1.bf16.msra.mxu0 %v972
        %1128 = vmatprep.subr.bf16.mxu0 0
        %1129 = vmatpush1.bf16.msra.mxu0 %v971
        %1130 = vmatprep.subr.bf16.mxu0 0
        %1131 = vmatpush1.bf16.msra.mxu0 %v970
        %1132 = vmatprep.subr.bf16.mxu0 0
        %1133 = vmatpush1.bf16.msra.mxu0 %v969
        %1134 = vmatprep.subr.bf16.mxu0 0
        %1135 = vmatpush1.bf16.msra.mxu0 %v968
        %1136 = vmatprep.subr.bf16.mxu0 0
        %1137 = vmatpush2.bf16.msra.mxu0 %v983
        %1138 = vmatprep.subr.bf16.mxu0 0
        %1139 = vmatpush2.bf16.msra.mxu0 %v982
        %1140 = vmatprep.subr.bf16.mxu0 0
        %1141 = vmatpush2.bf16.msra.mxu0 %v981
        %1142 = vmatprep.subr.bf16.mxu0 0
        %1143 = vmatpush2.bf16.msra.mxu0 %v980
        %1144 = vmatprep.subr.bf16.mxu0 0
        %1145 = vmatpush2.bf16.msra.mxu0 %v979
        %1146 = vmatprep.subr.bf16.mxu0 0
        %1147 = vmatpush2.bf16.msra.mxu0 %v978
        %1148 = vmatprep.subr.bf16.mxu0 0
        %1149 = vmatpush2.bf16.msra.mxu0 %v977
        %1150 = vmatprep.subr.bf16.mxu0 0
        %1151 = vmatpush2.bf16.msra.mxu0 %v976
        %1152 = vmatprep.mubr.bf16.mxu0 %v691
        %1153 = vmatmul.mubr.bf16.gmra.mxu0 %v690
        %v1154 = vpop.f32.mrf.mxu0
        %v1155 = vadd.f32 %v1115, %v1154
        %v1156 = vpop.f32.mrf.mxu0
        %v1157 = vpop.f32.mrf.mxu0
        %v1158 = vpop.f32.mrf.mxu0
        %1159 = vdwg.mxu0
        %1160 = vmatprep.subr.bf16.mxu0 0
        %1161 = vmatpush1.bf16.msra.mxu0 %v991
        %1162 = vmatprep.subr.bf16.mxu0 0
        %1163 = vmatpush1.bf16.msra.mxu0 %v990
        %1164 = vmatprep.subr.bf16.mxu0 0
        %1165 = vmatpush1.bf16.msra.mxu0 %v989
        %1166 = vmatprep.subr.bf16.mxu0 0
        %1167 = vmatpush1.bf16.msra.mxu0 %v988
        %1168 = vmatprep.subr.bf16.mxu0 0
        %1169 = vmatpush1.bf16.msra.mxu0 %v987
        %1170 = vmatprep.subr.bf16.mxu0 0
        %1171 = vmatpush1.bf16.msra.mxu0 %v986
        %1172 = vmatprep.subr.bf16.mxu0 0
        %1173 = vmatpush1.bf16.msra.mxu0 %v985
        %1174 = vmatprep.subr.bf16.mxu0 0
        %1175 = vmatpush1.bf16.msra.mxu0 %v984
        %1176 = vmatprep.subr.bf16.mxu0 0
        %1177 = vmatpush2.bf16.msra.mxu0 %v999
        %1178 = vmatprep.subr.bf16.mxu0 0
        %1179 = vmatpush2.bf16.msra.mxu0 %v998
        %1180 = vmatprep.subr.bf16.mxu0 0
        %1181 = vmatpush2.bf16.msra.mxu0 %v997
        %1182 = vmatprep.subr.bf16.mxu0 0
        %1183 = vmatpush2.bf16.msra.mxu0 %v996
        %1184 = vmatprep.subr.bf16.mxu0 0
        %1185 = vmatpush2.bf16.msra.mxu0 %v995
        %1186 = vmatprep.subr.bf16.mxu0 0
        %1187 = vmatpush2.bf16.msra.mxu0 %v994
        %1188 = vmatprep.subr.bf16.mxu0 0
        %1189 = vmatpush2.bf16.msra.mxu0 %v993
        %1190 = vmatprep.subr.bf16.mxu0 0
        %1191 = vmatpush2.bf16.msra.mxu0 %v992
        %1192 = vmatprep.mubr.bf16.mxu0 %v693
        %1193 = vmatmul.mubr.bf16.gmra.mxu0 %v692
        %v1194 = vpop.f32.mrf.mxu0
        %v1195 = vadd.f32 %v1155, %v1194
        %v1196 = vpop.f32.mrf.mxu0
        %v1197 = vpop.f32.mrf.mxu0
        %v1198 = vpop.f32.mrf.mxu0
        %1199 = vdwg.mxu0
        %1200 = vmatprep.subr.bf16.mxu0 0
        %1201 = vmatpush1.bf16.msra.mxu0 %v1007
        %1202 = vmatprep.subr.bf16.mxu0 0
        %1203 = vmatpush1.bf16.msra.mxu0 %v1006
        %1204 = vmatprep.subr.bf16.mxu0 0
        %1205 = vmatpush1.bf16.msra.mxu0 %v1005
        %1206 = vmatprep.subr.bf16.mxu0 0
        %1207 = vmatpush1.bf16.msra.mxu0 %v1004
        %1208 = vmatprep.subr.bf16.mxu0 0
        %1209 = vmatpush1.bf16.msra.mxu0 %v1003
        %1210 = vmatprep.subr.bf16.mxu0 0
        %1211 = vmatpush1.bf16.msra.mxu0 %v1002
        %1212 = vmatprep.subr.bf16.mxu0 0
        %1213 = vmatpush1.bf16.msra.mxu0 %v1001
        %1214 = vmatprep.subr.bf16.mxu0 0
        %1215 = vmatpush1.bf16.msra.mxu0 %v1000
        %1216 = vmatprep.subr.bf16.mxu0 0
        %1217 = vmatpush2.bf16.msra.mxu0 %v1015
        %1218 = vmatprep.subr.bf16.mxu0 0
        %1219 = vmatpush2.bf16.msra.mxu0 %v1014
        %1220 = vmatprep.subr.bf16.mxu0 0
        %1221 = vmatpush2.bf16.msra.mxu0 %v1013
        %1222 = vmatprep.subr.bf16.mxu0 0
        %1223 = vmatpush2.bf16.msra.mxu0 %v1012
        %1224 = vmatprep.subr.bf16.mxu0 0
        %1225 = vmatpush2.bf16.msra.mxu0 %v1011
        %1226 = vmatprep.subr.bf16.mxu0 0
        %1227 = vmatpush2.bf16.msra.mxu0 %v1010
        %1228 = vmatprep.subr.bf16.mxu0 0
        %1229 = vmatpush2.bf16.msra.mxu0 %v1009
        %1230 = vmatprep.subr.bf16.mxu0 0
        %1231 = vmatpush2.bf16.msra.mxu0 %v1008
        %1232 = vmatprep.mubr.bf16.mxu0 %v695
        %1233 = vmatmul.mubr.bf16.gmra.mxu0 %v694
        %v1234 = vpop.f32.mrf.mxu0
        %v1235 = vadd.f32 %v1195, %v1234
        %v1236 = vpop.f32.mrf.mxu0
        %v1237 = vpop.f32.mrf.mxu0
        %v1238 = vpop.f32.mrf.mxu0
        %1239 = vdwg.mxu0
        %v1240 = vadd.f32 %v679, %v1235
        %1241 = vst [vmem:[#allocation2] sm:$0xff] %v1240
        %p1242 = scmp.eq.s32.totalorder %s35, 1
        // Predicated region
        $region81: #{tpu_custom_call.1} parent=55 // pred_check
          %p1243 = pneg %p1242
        $region82: #{tpu_custom_call.1} parent=55 // pred_check_branch
          %1245 = sbr.rel (%p1243) target = $region84
        $region83: #{tpu_custom_call.1} parent=55 // pred_region
          %v1246 = vld [vmem:[#allocation2] sm:$0xff]
          %v1247 = vld [vmem:[%s512] sm:$0xff]
          %1249 = vset.pattern.permute.xlu0 0
          %1250 = vperm.xlu0 %1249, %v1247
          %v1251 = vpop.permute.xlu0 %1250
          %v1253 = vmul.f32 %v1246, %v1251
          %v1254 = vld [vmem:[%s508] sm:$0xf]
          %v1255 = vld [vmem:[#allocation9] sm:$0xff]
          %v1256 = vld [vmem:[#allocation9 + $0x8] sm:$0xff]
          %v1257 = vld [vmem:[#allocation9 + $0x10] sm:$0xff]
          %v1258 = vld [vmem:[#allocation9 + $0x18] sm:$0xff]
          %v1259 = vld [vmem:[#allocation9 + $0x20] sm:$0xff]
          %v1260 = vld [vmem:[#allocation9 + $0x28] sm:$0xff]
          %v1261 = vld [vmem:[#allocation9 + $0x30] sm:$0xff]
          %v1262 = vld [vmem:[#allocation9 + $0x38] sm:$0xff]
          %v1263 = vld [vmem:[#allocation9 + $0x40] sm:$0xff]
          %v1264 = vld [vmem:[#allocation9 + $0x48] sm:$0xff]
          %v1265 = vld [vmem:[#allocation9 + $0x50] sm:$0xff]
          %v1266 = vld [vmem:[#allocation9 + $0x58] sm:$0xff]
          %v1267 = vld [vmem:[#allocation9 + $0x60] sm:$0xff]
          %v1268 = vld [vmem:[#allocation9 + $0x68] sm:$0xff]
          %v1269 = vld [vmem:[#allocation9 + $0x70] sm:$0xff]
          %v1270 = vld [vmem:[#allocation9 + $0x78] sm:$0xff]
          %v1271 = vld [vmem:[%s5] sm:$0x1]
          %v1273 = vlaneseq
          %v1274 = vshrl.u32 %v1273, 7
          %v1275 = vsub.s32 0, %v1274
          %v1276 = vrot.slane %v1271, %v1275
          %1278 = vmatprep.subr.mxu0 0.0
          %1279 = vmatpush1.msra.mxu0 %v1270
          %1280 = vmatprep.subr.mxu0 0.0
          %1281 = vmatpush1.msra.mxu0 %v1269
          %1282 = vmatprep.subr.mxu0 0.0
          %1283 = vmatpush1.msra.mxu0 %v1268
          %1284 = vmatprep.subr.mxu0 0.0
          %1285 = vmatpush1.msra.mxu0 %v1267
          %1286 = vmatprep.subr.mxu0 0.0
          %1287 = vmatpush1.msra.mxu0 %v1266
          %1288 = vmatprep.subr.mxu0 0.0
          %1289 = vmatpush1.msra.mxu0 %v1265
          %1290 = vmatprep.subr.mxu0 0.0
          %1291 = vmatpush1.msra.mxu0 %v1264
          %1292 = vmatprep.subr.mxu0 0.0
          %1293 = vmatpush1.msra.mxu0 %v1263
          %1294 = vmatprep.subr.mxu0 0.0
          %1295 = vmatpush1.msra.mxu0 %v1262
          %1296 = vmatprep.subr.mxu0 0.0
          %1297 = vmatpush1.msra.mxu0 %v1261
          %1298 = vmatprep.subr.mxu0 0.0
          %1299 = vmatpush1.msra.mxu0 %v1260
          %1300 = vmatprep.subr.mxu0 0.0
          %1301 = vmatpush1.msra.mxu0 %v1259
          %1302 = vmatprep.subr.mxu0 0.0
          %1303 = vmatpush1.msra.mxu0 %v1258
          %1304 = vmatprep.subr.mxu0 0.0
          %1305 = vmatpush1.msra.mxu0 %v1257
          %1306 = vmatprep.subr.mxu0 0.0
          %1307 = vmatpush1.msra.mxu0 %v1256
          %1308 = vmatprep.subr.mxu0 0.0
          %1309 = vmatpush1.msra.mxu0 %v1255
          %1310 = vmatprep.subr.mxu0 0.0
          %1311 = vmatpush2.msra.mxu0 0.0
          %1312 = vmatprep.subr.mxu0 0.0
          %1313 = vmatpush2.msra.mxu0 0.0
          %1314 = vmatprep.subr.mxu0 0.0
          %1315 = vmatpush2.msra.mxu0 0.0
          %1316 = vmatprep.subr.mxu0 0.0
          %1317 = vmatpush2.msra.mxu0 0.0
          %1318 = vmatprep.subr.mxu0 0.0
          %1319 = vmatpush2.msra.mxu0 0.0
          %1320 = vmatprep.subr.mxu0 0.0
          %1321 = vmatpush2.msra.mxu0 0.0
          %1322 = vmatprep.subr.mxu0 0.0
          %1323 = vmatpush2.msra.mxu0 0.0
          %1324 = vmatprep.subr.mxu0 0.0
          %1325 = vmatpush2.msra.mxu0 0.0
          %1326 = vmatprep.subr.mxu0 0.0
          %1327 = vmatpush2.msra.mxu0 0.0
          %1328 = vmatprep.subr.mxu0 0.0
          %1329 = vmatpush2.msra.mxu0 0.0
          %1330 = vmatprep.subr.mxu0 0.0
          %1331 = vmatpush2.msra.mxu0 0.0
          %1332 = vmatprep.subr.mxu0 0.0
          %1333 = vmatpush2.msra.mxu0 0.0
          %1334 = vmatprep.subr.mxu0 0.0
          %1335 = vmatpush2.msra.mxu0 0.0
          %1336 = vmatprep.subr.mxu0 0.0
          %1337 = vmatpush2.msra.mxu0 0.0
          %1338 = vmatprep.subr.mxu0 0.0
          %1339 = vmatpush2.msra.mxu0 0.0
          %1340 = vmatprep.subr.mxu0 0.0
          %1341 = vmatpush2.msra.mxu0 0.0
          %1342 = vmatprep.mubr.bf16.mxu0 0
          %1343 = vmatmul.mubr.bf16.gmra.mxu0 %v1254
          %v1344 = vpop.f32.mrf.mxu0
          %v1345 = vadd.f32 %v1276, %v1344
          %v1346 = vpop.f32.mrf.mxu0
          %v1347 = vpop.f32.mrf.mxu0
          %v1348 = vpop.f32.mrf.mxu0
          %1349 = vdwg.mxu0
          %v1350 = vtanh.pop %v1345
          %v1351 = vld [vmem:[#allocation10] sm:$0xff]
          %v1352 = vld [vmem:[#allocation10 + $0x8] sm:$0xff]
          %v1353 = vld [vmem:[#allocation10 + $0x10] sm:$0xff]
          %v1354 = vld [vmem:[#allocation10 + $0x18] sm:$0xff]
          %v1355 = vld [vmem:[#allocation10 + $0x20] sm:$0xff]
          %v1356 = vld [vmem:[#allocation10 + $0x28] sm:$0xff]
          %v1357 = vld [vmem:[#allocation10 + $0x30] sm:$0xff]
          %v1358 = vld [vmem:[#allocation10 + $0x38] sm:$0xff]
          %v1359 = vld [vmem:[#allocation10 + $0x40] sm:$0xff]
          %v1360 = vld [vmem:[#allocation10 + $0x48] sm:$0xff]
          %v1361 = vld [vmem:[#allocation10 + $0x50] sm:$0xff]
          %v1362 = vld [vmem:[#allocation10 + $0x58] sm:$0xff]
          %v1363 = vld [vmem:[#allocation10 + $0x60] sm:$0xff]
          %v1364 = vld [vmem:[#allocation10 + $0x68] sm:$0xff]
          %v1365 = vld [vmem:[#allocation10 + $0x70] sm:$0xff]
          %v1366 = vld [vmem:[#allocation10 + $0x78] sm:$0xff]
          %v1367 = vld [vmem:[#allocation12] sm:$0xff]
          %v1368 = vld [vmem:[#allocation12 + $0x8] sm:$0xff]
          %v1369 = vld [vmem:[#allocation12 + $0x10] sm:$0xff]
          %v1370 = vld [vmem:[#allocation12 + $0x18] sm:$0xff]
          %v1371 = vld [vmem:[#allocation12 + $0x20] sm:$0xff]
          %v1372 = vld [vmem:[#allocation12 + $0x28] sm:$0xff]
          %v1373 = vld [vmem:[#allocation12 + $0x30] sm:$0xff]
          %v1374 = vld [vmem:[#allocation12 + $0x38] sm:$0xff]
          %v1375 = vld [vmem:[#allocation12 + $0x40] sm:$0xff]
          %v1376 = vld [vmem:[#allocation12 + $0x48] sm:$0xff]
          %v1377 = vld [vmem:[#allocation12 + $0x50] sm:$0xff]
          %v1378 = vld [vmem:[#allocation12 + $0x58] sm:$0xff]
          %v1379 = vld [vmem:[#allocation12 + $0x60] sm:$0xff]
          %v1380 = vld [vmem:[#allocation12 + $0x68] sm:$0xff]
          %v1381 = vld [vmem:[#allocation12 + $0x70] sm:$0xff]
          %v1382 = vld [vmem:[#allocation12 + $0x78] sm:$0xff]
          %1383 = vmatprep.subr.mxu0 0.0
          %1384 = vmatpush1.msra.mxu0 %v1382
          %1385 = vmatprep.subr.mxu0 0.0
          %1386 = vmatpush1.msra.mxu0 %v1381
          %1387 = vmatprep.subr.mxu0 0.0
          %1388 = vmatpush1.msra.mxu0 %v1380
          %1389 = vmatprep.subr.mxu0 0.0
          %1390 = vmatpush1.msra.mxu0 %v1379
          %1391 = vmatprep.subr.mxu0 0.0
          %1392 = vmatpush1.msra.mxu0 %v1378
          %1393 = vmatprep.subr.mxu0 0.0
          %1394 = vmatpush1.msra.mxu0 %v1377
          %1395 = vmatprep.subr.mxu0 0.0
          %1396 = vmatpush1.msra.mxu0 %v1376
          %1397 = vmatprep.subr.mxu0 0.0
          %1398 = vmatpush1.msra.mxu0 %v1375
          %1399 = vmatprep.subr.mxu0 0.0
          %1400 = vmatpush1.msra.mxu0 %v1374
          %1401 = vmatprep.subr.mxu0 0.0
          %1402 = vmatpush1.msra.mxu0 %v1373
          %1403 = vmatprep.subr.mxu0 0.0
          %1404 = vmatpush1.msra.mxu0 %v1372
          %1405 = vmatprep.subr.mxu0 0.0
          %1406 = vmatpush1.msra.mxu0 %v1371
          %1407 = vmatprep.subr.mxu0 0.0
          %1408 = vmatpush1.msra.mxu0 %v1370
          %1409 = vmatprep.subr.mxu0 0.0
          %1410 = vmatpush1.msra.mxu0 %v1369
          %1411 = vmatprep.subr.mxu0 0.0
          %1412 = vmatpush1.msra.mxu0 %v1368
          %1413 = vmatprep.subr.mxu0 0.0
          %1414 = vmatpush1.msra.mxu0 %v1367
          %1415 = vmatprep.subr.mxu0 0.0
          %1416 = vmatpush2.msra.mxu0 0.0
          %1417 = vmatprep.subr.mxu0 0.0
          %1418 = vmatpush2.msra.mxu0 0.0
          %1419 = vmatprep.subr.mxu0 0.0
          %1420 = vmatpush2.msra.mxu0 0.0
          %1421 = vmatprep.subr.mxu0 0.0
          %1422 = vmatpush2.msra.mxu0 0.0
          %1423 = vmatprep.subr.mxu0 0.0
          %1424 = vmatpush2.msra.mxu0 0.0
          %1425 = vmatprep.subr.mxu0 0.0
          %1426 = vmatpush2.msra.mxu0 0.0
          %1427 = vmatprep.subr.mxu0 0.0
          %1428 = vmatpush2.msra.mxu0 0.0
          %1429 = vmatprep.subr.mxu0 0.0
          %1430 = vmatpush2.msra.mxu0 0.0
          %1431 = vmatprep.subr.mxu0 0.0
          %1432 = vmatpush2.msra.mxu0 0.0
          %1433 = vmatprep.subr.mxu0 0.0
          %1434 = vmatpush2.msra.mxu0 0.0
          %1435 = vmatprep.subr.mxu0 0.0
          %1436 = vmatpush2.msra.mxu0 0.0
          %1437 = vmatprep.subr.mxu0 0.0
          %1438 = vmatpush2.msra.mxu0 0.0
          %1439 = vmatprep.subr.mxu0 0.0
          %1440 = vmatpush2.msra.mxu0 0.0
          %1441 = vmatprep.subr.mxu0 0.0
          %1442 = vmatpush2.msra.mxu0 0.0
          %1443 = vmatprep.subr.mxu0 0.0
          %1444 = vmatpush2.msra.mxu0 0.0
          %1445 = vmatprep.subr.mxu0 0.0
          %1446 = vmatpush2.msra.mxu0 0.0
          %1447 = vmatprep.mubr.f32.mxu0 0.0
          %1448 = vmatmul.mubr.f32.gmra.mxu0 %v1253
          %v1449 = vpop.f32.mrf.mxu0
          %v1450 = vadd.f32 0.0, %v1449
          %v1451 = vpop.f32.mrf.mxu0
          %1452 = vdwg.mxu0
          %1453 = vmatprep.subr.mxu0 0.0
          %1454 = vmatpush1.msra.mxu0 %v1366
          %1455 = vmatprep.subr.mxu0 0.0
          %1456 = vmatpush1.msra.mxu0 %v1365
          %1457 = vmatprep.subr.mxu0 0.0
          %1458 = vmatpush1.msra.mxu0 %v1364
          %1459 = vmatprep.subr.mxu0 0.0
          %1460 = vmatpush1.msra.mxu0 %v1363
          %1461 = vmatprep.subr.mxu0 0.0
          %1462 = vmatpush1.msra.mxu0 %v1362
          %1463 = vmatprep.subr.mxu0 0.0
          %1464 = vmatpush1.msra.mxu0 %v1361
          %1465 = vmatprep.subr.mxu0 0.0
          %1466 = vmatpush1.msra.mxu0 %v1360
          %1467 = vmatprep.subr.mxu0 0.0
          %1468 = vmatpush1.msra.mxu0 %v1359
          %1469 = vmatprep.subr.mxu0 0.0
          %1470 = vmatpush1.msra.mxu0 %v1358
          %1471 = vmatprep.subr.mxu0 0.0
          %1472 = vmatpush1.msra.mxu0 %v1357
          %1473 = vmatprep.subr.mxu0 0.0
          %1474 = vmatpush1.msra.mxu0 %v1356
          %1475 = vmatprep.subr.mxu0 0.0
          %1476 = vmatpush1.msra.mxu0 %v1355
          %1477 = vmatprep.subr.mxu0 0.0
          %1478 = vmatpush1.msra.mxu0 %v1354
          %1479 = vmatprep.subr.mxu0 0.0
          %1480 = vmatpush1.msra.mxu0 %v1353
          %1481 = vmatprep.subr.mxu0 0.0
          %1482 = vmatpush1.msra.mxu0 %v1352
          %1483 = vmatprep.subr.mxu0 0.0
          %1484 = vmatpush1.msra.mxu0 %v1351
          %1485 = vmatprep.subr.mxu0 0.0
          %1486 = vmatpush2.msra.mxu0 0.0
          %1487 = vmatprep.subr.mxu0 0.0
          %1488 = vmatpush2.msra.mxu0 0.0
          %1489 = vmatprep.subr.mxu0 0.0
          %1490 = vmatpush2.msra.mxu0 0.0
          %1491 = vmatprep.subr.mxu0 0.0
          %1492 = vmatpush2.msra.mxu0 0.0
          %1493 = vmatprep.subr.mxu0 0.0
          %1494 = vmatpush2.msra.mxu0 0.0
          %1495 = vmatprep.subr.mxu0 0.0
          %1496 = vmatpush2.msra.mxu0 0.0
          %1497 = vmatprep.subr.mxu0 0.0
          %1498 = vmatpush2.msra.mxu0 0.0
          %1499 = vmatprep.subr.mxu0 0.0
          %1500 = vmatpush2.msra.mxu0 0.0
          %1501 = vmatprep.subr.mxu0 0.0
          %1502 = vmatpush2.msra.mxu0 0.0
          %1503 = vmatprep.subr.mxu0 0.0
          %1504 = vmatpush2.msra.mxu0 0.0
          %1505 = vmatprep.subr.mxu0 0.0
          %1506 = vmatpush2.msra.mxu0 0.0
          %1507 = vmatprep.subr.mxu0 0.0
          %1508 = vmatpush2.msra.mxu0 0.0
          %1509 = vmatprep.subr.mxu0 0.0
          %1510 = vmatpush2.msra.mxu0 0.0
          %1511 = vmatprep.subr.mxu0 0.0
          %1512 = vmatpush2.msra.mxu0 0.0
          %1513 = vmatprep.subr.mxu0 0.0
          %1514 = vmatpush2.msra.mxu0 0.0
          %1515 = vmatprep.subr.mxu0 0.0
          %1516 = vmatpush2.msra.mxu0 0.0
          %1517 = vmatprep.mubr.f32.mxu0 0.0
          %1518 = vmatmul.mubr.f32.gmra.mxu0 %v1350
          %v1519 = vpop.f32.mrf.mxu0
          %v1520 = vadd.f32 %v1450, %v1519
          %v1521 = vpop.f32.mrf.mxu0
          %1522 = vdwg.mxu0
          %v1523 = vld [vmem:[%s8] sm:$0x1]
          %v1525 = vlaneseq
          %v1526 = vshrl.u32 %v1525, 7
          %v1527 = vsub.s32 0, %v1526
          %v1528 = vrot.slane %v1523, %v1527
          %v1530 = vadd.f32 %v1520, %v1528
          %1531 = vst [vmem:[%s502] sm:$0xff] %v1530
        $region84: #{tpu_custom_call.1} parent=55 // pred_fallthru
          _
        %s1532 = sand.u32 %s263, 1
        %s1533 = scalar_lea.sflag [#allocation6], %s1532
        %s1534 = sand.u32 %s263, 1
        %s1535 = smul.addr %s1534, 8
        %s1536 = scalar_lea.vmem [#allocation13], %s1535
        // Predicated region
        $region85: #{tpu_custom_call.1} parent=55 // pred_check
          %p1537 = pneg %p273
        $region86: #{tpu_custom_call.1} parent=55 // pred_check_branch
          %1539 = sbr.rel (%p1537) target = $region88
        $region87: #{tpu_custom_call.1} parent=55 // pred_region
          %s1541 = ssub.s32 128, 128
          %1542 = vsyncadd %s1533, %s1541
          %s1543 = smul.addr %s34, 128
          %s1544 = scalar_lea.hbm %s9, %s1543
          %s1546 = sshll.u32 %s1536, 4
          %s1547 = int_to_ptr.vmem [resolvable:$true] %s1546
          %1549 = dma.vmem_to_hbm [thread:$0]  %s1547, 128, %s1544, %s1533
        $region88: #{tpu_custom_call.1} parent=55 // pred_fallthru
          _
      $region56: #{tpu_custom_call.1} parent=5 // pred_fallthru
        _
      %p1550 = scmp.le.s32.totalorder 2, %s25
      // Predicated region
      $region89: #{tpu_custom_call.1} parent=5 // pred_check
        %p1551 = pneg %p1550
      $region90: #{tpu_custom_call.1} parent=5 // pred_check_branch
        %1553 = sbr.rel (%p1551) target = $region92
      $region91: #{tpu_custom_call.1} parent=5 // pred_region
        %s1554 = ssub.s32 %s25, 2
        // Predicated region
        $region93: #{tpu_custom_call.1} parent=91 // pred_check
          %p1555 = pneg %p279
        $region94: #{tpu_custom_call.1} parent=91 // pred_check_branch
          %1557 = sbr.rel (%p1555) target = $region96
        $region95: #{tpu_custom_call.1} parent=91 // pred_region
          %s1558 = sand.u32 %s264, 1
          %s1559 = scalar_lea.sflag [#allocation6], %s1558
          %s1560 = sand.u32 %s264, 1
          %s1561 = smul.addr %s1560, 8
          %s1562 = scalar_lea.vmem [#allocation13], %s1561
          %1563 = dma.done %s1559, 128
        $region96: #{tpu_custom_call.1} parent=91 // pred_fallthru
          _
      $region92: #{tpu_custom_call.1} parent=5 // pred_fallthru
        _
    $region6: #{tpu_custom_call.1} parent=1 // loop_footer
      %s29 = sadd.s32 1, %s25
    $region7: #{tpu_custom_call.1} parent=1 // loop_footer_branch
      %24 = sbr.rel target = $region3
    $region8: #{tpu_custom_call.1} parent=1 // loop_exit
      _
    %1564 = vsyncpa [#allocation5], 1
    %s1565 = scalar_lea.sflag [#allocation5], 1
    %1566 = vsyncpa %s1565, 1
    %1567 = vsyncpa [#allocation8], 1
    %s1568 = scalar_lea.sflag [#allocation8], 1
    %1569 = vsyncpa %s1568, 1
    %1570 = vsyncpa [#allocation11], 1
    %1571 = vsyncpa [#allocation6], 1
    %s1572 = scalar_lea.sflag [#allocation6], 1
    %1573 = vsyncpa %s1572, 1

</llo_original>
